<compile_context>
chip_gen: v5e
topology: v5e:2x2
jax: 0.10.0
libtpu: 0.0.40
codegen_flags: <defaults>
</compile_context>

<pallas_src>
import jax
import jax.numpy as jnp
from jax.experimental import pallas as pl
from jax.experimental.pallas import tpu as pltpu

IN_DIM = 28 * 28      # 784
H1 = 512
H2 = 256
OUT_DIM = 1


def _round_up(x, m):
    return ((x + m - 1) // m) * m


def _select_tb(b):
    """Batch-tile selection.

    * b <= 128: a single tile rounded up to a multiple of 16 rows (bf16
      sublane packing of the in-kernel cast; f32 sublane=8 also satisfied).
    * 128 < b <= 512: split into (at least) two grid steps so the x DMA
      pipelines behind compute and v7x can shard the 'parallel' axis across
      both TensorCores.
    * b > 512: fixed 256-row tiles -> MXU-friendly M, plenty of parallel
      steps, pad waste bounded by <256 rows.
    """
    b16 = _round_up(b, 16)
    if b16 <= 128:
        return b16
    if b16 <= 512:
        return _round_up((b16 + 1) // 2, 16)
    return 256


def _mlp_kernel(x_ref, w1_ref, b1_ref, w2_ref, b2_ref, w3_ref, b3_ref, o_ref):
    # In-kernel f32 -> bf16 cast of the activation tile.
    x_bf = x_ref[...].astype(jnp.bfloat16)
    # fc1 + ReLU: bf16 operands on the MXU, f32 accumulation, f32 epilogue.
    h1 = jnp.dot(x_bf, w1_ref[...], preferred_element_type=jnp.float32)
    h1 = jnp.maximum(h1 + b1_ref[...], 0.0)
    # fc2 + ReLU (h1 re-cast to bf16 for the MXU).
    h2 = jnp.dot(h1.astype(jnp.bfloat16), w2_ref[...],
                 preferred_element_type=jnp.float32)
    h2 = jnp.maximum(h2 + b2_ref[...], 0.0)
    # fc3 (out_dim == 1): VPU multiply + XLU lane reduction (MXU is the
    # saturated unit; a 1-column matmul would waste it).  w3_ref: (1, H2) f32.
    h3 = jnp.sum(h2 * w3_ref[...], axis=-1, keepdims=True) + b3_ref[...]
    o_ref[...] = jax.nn.sigmoid(h3)


def prepare_params(params):
    """One-time preprocessing of the f32 parameters for the kernel:
    bf16 weight casts, fc3 weight reshaped to a (1, H2) row.  Call once,
    not per forward pass."""
    w1, b1, w2, b2, w3, b3 = params
    return (
        w1.astype(jnp.bfloat16),                         # (784, 512) bf16
        b1.reshape(1, H1).astype(jnp.float32),           # (1, 512)   f32
        w2.astype(jnp.bfloat16),                         # (512, 256) bf16
        b2.reshape(1, H2).astype(jnp.float32),           # (1, 256)   f32
        w3.reshape(H2, OUT_DIM).T.astype(jnp.float32),   # (1, 256)   f32
        b3.reshape(1, OUT_DIM).astype(jnp.float32),      # (1, 1)     f32
    )


@jax.jit
def discriminator_forward(x, prepared_params):
    """x: any shape whose trailing elements flatten to 784 per sample.
    prepared_params: output of prepare_params()."""
    w1_bf, b1f, w2_bf, b2f, w3_row, b3f = prepared_params
    x2d = x.reshape(-1, IN_DIM).astype(jnp.float32)
    b = x2d.shape[0]

    tb = _select_tb(b)
    b_pad = _round_up(b, tb)
    if b_pad != b:
        # Pad the batch only (no K padding); padded rows are computed and
        # sliced off at the end.
        x2d = jnp.pad(x2d, ((0, b_pad - b), (0, 0)))

    grid = (b_pad // tb,)
    out = pl.pallas_call(
        _mlp_kernel,
        out_shape=jax.ShapeDtypeStruct((b_pad, OUT_DIM), jnp.float32),
        grid_spec=pltpu.PrefetchScalarGridSpec(
            num_scalar_prefetch=0,
            grid=grid,
            in_specs=[
                pl.BlockSpec((tb, IN_DIM), lambda i: (i, 0)),   # x tile (f32)
                pl.BlockSpec((IN_DIM, H1), lambda i: (0, 0)),   # w1 (bf16)
                pl.BlockSpec((1, H1), lambda i: (0, 0)),        # b1 (f32)
                pl.BlockSpec((H1, H2), lambda i: (0, 0)),       # w2 (bf16)
                pl.BlockSpec((1, H2), lambda i: (0, 0)),        # b2 (f32)
                pl.BlockSpec((1, H2), lambda i: (0, 0)),        # w3 row (f32)
                pl.BlockSpec((1, OUT_DIM), lambda i: (0, 0)),   # b3 (f32)
            ],
            out_specs=pl.BlockSpec((tb, OUT_DIM), lambda i: (i, 0)),
        ),
        compiler_params=pltpu.CompilerParams(
            dimension_semantics=("parallel",)),
    )(x2d, w1_bf, b1f, w2_bf, b2f, w3_row, b3f)

    return out[:b]


def init_params(key):
    """Deterministic init mimicking nn.Linear default (uniform +/- 1/sqrt(fan_in)).
    Weights stored transposed as (in, out); biases as (1, out)."""
    ks = jax.random.split(key, 6)

    def lin(kw, kb, fan_in, fan_out):
        bound = 1.0 / jnp.sqrt(float(fan_in))
        w = jax.random.uniform(kw, (fan_in, fan_out), jnp.float32, -bound, bound)
        b = jax.random.uniform(kb, (1, fan_out), jnp.float32, -bound, bound)
        return w, b

    w1, b1 = lin(ks[0], ks[1], IN_DIM, H1)
    w2, b2 = lin(ks[2], ks[3], H1, H2)
    w3, b3 = lin(ks[4], ks[5], H2, OUT_DIM)
    return (w1, b1, w2, b2, w3, b3)


def _reference_forward(x, params):
    w1, b1, w2, b2, w3, b3 = params
    h = x.reshape(-1, IN_DIM).astype(jnp.float32)
    h = jax.nn.relu(h @ w1 + b1)
    h = jax.nn.relu(h @ w2 + b2)
    return jax.nn.sigmoid(h @ w3 + b3)


if __name__ == "__main__":
    key = jax.random.PRNGKey(0)
    k_param, k_x = jax.random.split(key)
    params = init_params(k_param)
    prepared = prepare_params(params)   # one-time weight cast / reshape

    # Small MNIST-like batch: (batch=2, channels=1, 28, 28) NCHW.
    x = jax.random.normal(k_x, (2, 1, 28, 28), dtype=jnp.float32)

    out = discriminator_forward(x, prepared)
    out = jax.block_until_ready(out)

    ref = _reference_forward(x, params)
    assert out.shape == (2, 1), out.shape
    # bf16 matmul operands with f32 accumulation -> loosened tolerance.
    assert jnp.allclose(out, ref, atol=2e-2, rtol=2e-2), (out, ref)
    print("KERNEL_OK")
</pallas_src>

<mosaic_0001>
module attributes {stable_mosaic.version = 11 : i64} {
  func.func @_mlp_kernel(%arg0: i32, %arg1: memref<16x784xf32, #tpu.memory_space<vmem>>, %arg2: memref<784x512xbf16, #tpu.memory_space<vmem>>, %arg3: memref<1x512xf32, #tpu.memory_space<vmem>>, %arg4: memref<512x256xbf16, #tpu.memory_space<vmem>>, %arg5: memref<1x256xf32, #tpu.memory_space<vmem>>, %arg6: memref<1x256xf32, #tpu.memory_space<vmem>>, %arg7: memref<1x1xf32, #tpu.memory_space<vmem>>, %arg8: memref<16x1xf32, #tpu.memory_space<vmem>>) attributes {dimension_semantics = [#tpu.dimension_semantics<parallel>], iteration_bounds = array<i64: 1>, scalar_prefetch = 0 : i64, scratch_operands = 0 : i64, tpu.core_type = #tpu.core_type<tc>, window_params = [{transform_indices = @transform_0, window_bounds = array<i64: 16, 784>}, {pipeline_mode = #tpu.pipeline_mode<synchronous>, transform_indices = @transform_1, window_bounds = array<i64: 784, 512>}, {pipeline_mode = #tpu.pipeline_mode<synchronous>, transform_indices = @transform_2, window_bounds = array<i64: 1, 512>}, {pipeline_mode = #tpu.pipeline_mode<synchronous>, transform_indices = @transform_3, window_bounds = array<i64: 512, 256>}, {pipeline_mode = #tpu.pipeline_mode<synchronous>, transform_indices = @transform_4, window_bounds = array<i64: 1, 256>}, {pipeline_mode = #tpu.pipeline_mode<synchronous>, transform_indices = @transform_5, window_bounds = array<i64: 1, 256>}, {pipeline_mode = #tpu.pipeline_mode<synchronous>, transform_indices = @transform_6, window_bounds = array<i64: 1, 1>}, {transform_indices = @transform_7, window_bounds = array<i64: 16, 1>}]} {
    %c0 = arith.constant 0 : index
    %c0_0 = arith.constant 0 : index
    %0 = vector.load %arg1[%c0, %c0_0] : memref<16x784xf32, #tpu.memory_space<vmem>>, vector<16x784xf32>
    %1 = arith.truncf %0 : vector<16x784xf32> to vector<16x784xbf16>
    %c0_1 = arith.constant 0 : index
    %c0_2 = arith.constant 0 : index
    %2 = vector.load %arg2[%c0_1, %c0_2] : memref<784x512xbf16, #tpu.memory_space<vmem>>, vector<784x512xbf16>
    %cst = arith.constant dense<0.000000e+00> : vector<16x512xf32>
    %3 = tpu.matmul %1, %2, %cst {dimension_numbers = #tpu.dot_dimension_numbers<[1], [0], [0], [1], [0, 0, 1, 1], [], []>} : vector<16x784xbf16>, vector<784x512xbf16>, vector<16x512xf32> -> vector<16x512xf32>
    %c0_3 = arith.constant 0 : index
    %c0_4 = arith.constant 0 : index
    %4 = vector.load %arg3[%c0_3, %c0_4] : memref<1x512xf32, #tpu.memory_space<vmem>>, vector<1x512xf32>
    %5 = vector.broadcast %4 : vector<1x512xf32> to vector<16x512xf32>
    %6 = arith.addf %3, %5 : vector<16x512xf32>
    %cst_5 = arith.constant 0.000000e+00 : f32
    %7 = vector.broadcast %cst_5 : f32 to vector<16x512xf32>
    %8 = arith.maximumf %6, %7 : vector<16x512xf32>
    %9 = arith.truncf %8 : vector<16x512xf32> to vector<16x512xbf16>
    %c0_6 = arith.constant 0 : index
    %c0_7 = arith.constant 0 : index
    %10 = vector.load %arg4[%c0_6, %c0_7] : memref<512x256xbf16, #tpu.memory_space<vmem>>, vector<512x256xbf16>
    %cst_8 = arith.constant dense<0.000000e+00> : vector<16x256xf32>
    %11 = tpu.matmul %9, %10, %cst_8 {dimension_numbers = #tpu.dot_dimension_numbers<[1], [0], [0], [1], [0, 0, 1, 1], [], []>} : vector<16x512xbf16>, vector<512x256xbf16>, vector<16x256xf32> -> vector<16x256xf32>
    %c0_9 = arith.constant 0 : index
    %c0_10 = arith.constant 0 : index
    %12 = vector.load %arg5[%c0_9, %c0_10] : memref<1x256xf32, #tpu.memory_space<vmem>>, vector<1x256xf32>
    %13 = vector.broadcast %12 : vector<1x256xf32> to vector<16x256xf32>
    %14 = arith.addf %11, %13 : vector<16x256xf32>
    %cst_11 = arith.constant 0.000000e+00 : f32
    %15 = vector.broadcast %cst_11 : f32 to vector<16x256xf32>
    %16 = arith.maximumf %14, %15 : vector<16x256xf32>
    %c0_12 = arith.constant 0 : index
    %c0_13 = arith.constant 0 : index
    %17 = vector.load %arg6[%c0_12, %c0_13] : memref<1x256xf32, #tpu.memory_space<vmem>>, vector<1x256xf32>
    %18 = vector.broadcast %17 : vector<1x256xf32> to vector<16x256xf32>
    %19 = arith.mulf %16, %18 : vector<16x256xf32>
    %cst_14 = arith.constant dense<0.000000e+00> : vector<16xf32>
    %20 = vector.multi_reduction <add>, %19, %cst_14 [1] : vector<16x256xf32> to vector<16xf32>
    %21 = vector.shape_cast %20 : vector<16xf32> to vector<16x1xf32>
    %c0_15 = arith.constant 0 : index
    %c0_16 = arith.constant 0 : index
    %22 = vector.load %arg7[%c0_15, %c0_16] : memref<1x1xf32, #tpu.memory_space<vmem>>, vector<1x1xf32>
    %23 = vector.broadcast %22 : vector<1x1xf32> to vector<16x1xf32>
    %24 = arith.addf %21, %23 : vector<16x1xf32>
    %25 = arith.negf %24 : vector<16x1xf32>
    %26 = math.exp %25 : vector<16x1xf32>
    %cst_17 = arith.constant 1.000000e+00 : f32
    %27 = vector.broadcast %cst_17 : f32 to vector<16x1xf32>
    %28 = arith.addf %27, %26 : vector<16x1xf32>
    %29 = arith.divf %27, %28 : vector<16x1xf32>
    %c0_18 = arith.constant 0 : index
    %c0_19 = arith.constant 0 : index
    %30 = vector.load %arg8[%c0_18, %c0_19] : memref<16x1xf32, #tpu.memory_space<vmem>>, vector<16x1xf32>
    tpu.vector_store %arg8[%c0_18, %c0_19], %29 {strides = array<i32>} : memref<16x1xf32, #tpu.memory_space<vmem>>, vector<16x1xf32>,
    return
  }
  func.func @transform_0(%arg0: i32) -> (i32, i32) {
    %c0_i32 = arith.constant 0 : i32
    %c0_i32_0 = arith.constant 0 : i32
    return %arg0, %c0_i32 : i32, i32
  }
  func.func @transform_1(%arg0: i32) -> (i32, i32) {
    %c0_i32 = arith.constant 0 : i32
    %c0_i32_0 = arith.constant 0 : i32
    %c0_i32_1 = arith.constant 0 : i32
    return %c0_i32, %c0_i32_0 : i32, i32
  }
  func.func @transform_2(%arg0: i32) -> (i32, i32) {
    %c0_i32 = arith.constant 0 : i32
    %c0_i32_0 = arith.constant 0 : i32
    %c0_i32_1 = arith.constant 0 : i32
    return %c0_i32, %c0_i32_0 : i32, i32
  }
  func.func @transform_3(%arg0: i32) -> (i32, i32) {
    %c0_i32 = arith.constant 0 : i32
    %c0_i32_0 = arith.constant 0 : i32
    %c0_i32_1 = arith.constant 0 : i32
    return %c0_i32, %c0_i32_0 : i32, i32
  }
  func.func @transform_4(%arg0: i32) -> (i32, i32) {
    %c0_i32 = arith.constant 0 : i32
    %c0_i32_0 = arith.constant 0 : i32
    %c0_i32_1 = arith.constant 0 : i32
    return %c0_i32, %c0_i32_0 : i32, i32
  }
  func.func @transform_5(%arg0: i32) -> (i32, i32) {
    %c0_i32 = arith.constant 0 : i32
    %c0_i32_0 = arith.constant 0 : i32
    %c0_i32_1 = arith.constant 0 : i32
    return %c0_i32, %c0_i32_0 : i32, i32
  }
  func.func @transform_6(%arg0: i32) -> (i32, i32) {
    %c0_i32 = arith.constant 0 : i32
    %c0_i32_0 = arith.constant 0 : i32
    %c0_i32_1 = arith.constant 0 : i32
    return %c0_i32, %c0_i32_0 : i32, i32
  }
  func.func @transform_7(%arg0: i32) -> (i32, i32) {
    %c0_i32 = arith.constant 0 : i32
    %c0_i32_0 = arith.constant 0 : i32
    return %arg0, %c0_i32 : i32, i32
  }
}

</mosaic_0001>

<llo_original>
// kernel: discriminator_forward.1
$region0: #{discriminator_forward.1}
  #allocation0 [shape = 'u32[]', space=smem, size = 0x4, offset = 0x4, fixed_abs, tag = 'smem constant byte address 0x4 - core index']
  #allocation1 [shape = 'u32[72,128]{1,0:T(1,128)}', space=vmem, size = 0x9000, scoped, tag = 'internal scratch']
  #allocation2 [shape = 'f32[1,1]{1,0:T(1,128)S(1)}', space=vmem, size = 0x200, scoped, tag = 'scoped memory for discriminator_forward.1']
  %s0 = inlined_call_operand.vmem [shape: f32[16,784], index: 0, kind: input, shape index: {}]
  %s1 = inlined_call_operand.hbm [shape: bf16[784,512], index: 1, kind: input, shape index: {}]
  %s2 = inlined_call_operand.vmem [shape: f32[1,512], index: 2, kind: input, shape index: {}]
  %s3 = inlined_call_operand.hbm [shape: bf16[512,256], index: 3, kind: input, shape index: {}]
  %s4 = inlined_call_operand.vmem [shape: f32[1,256], index: 4, kind: input, shape index: {}]
  %s5 = inlined_call_operand.vmem [shape: f32[1,256], index: 5, kind: input, shape index: {}]
  %s6 = inlined_call_operand.<no memory space> [shape: f32[1,1], index: 6, kind: input, shape index: {}]
  %s7 = inlined_call_operand.vmem [shape: f32[16,1], index: 7, kind: output, shape index: {}]
  %s8 = sld [smem:[#allocation0]]
  $region46: #{discriminator_forward.1} parent=0
    _
  %s10 = ssub.s32 1, %s8
  %s11 = scalar_select 0, %s10, %s8
  %v12 = vstv %s6
  %13 = vst [vmem:[#allocation2] sm:$0x1] %v12
  $region1: #{discriminator_forward.1} parent=0
    #allocation3 [shape = 'u8[802816]{0}', space=vmem, size = 0xc4000, scoped, tag = 'input window, operand 1, single buffered']
    #allocation4 [shape = 's32[1]{0}', space=sflag, size = 0x4, scoped, tag = 'scoped memory for discriminator_forward.1']
    #allocation5 [shape = 'u8[262144]{0}', space=vmem, size = 0x40000, scoped, tag = 'input window, operand 3, single buffered']
    #allocation6 [shape = 's32[1]{0}', space=sflag, size = 0x4, scoped, tag = 'scoped memory for discriminator_forward.1']
    %14 = vsyncpa [#allocation4], 0
    %15 = vsyncpa [#allocation6], 0
    // Predicated region
    $region2: #{discriminator_forward.1} parent=1 // pred_check
      _
    $region3: #{discriminator_forward.1} parent=1 // pred_check_branch
      %17 = sbr.rel (0) target = $region5
    $region4: #{discriminator_forward.1} parent=1 // pred_region
      _
    $region5: #{discriminator_forward.1} parent=1 // pred_fallthru
      _
    // Predicated region
    $region6: #{discriminator_forward.1} parent=1 // pred_check
      _
    $region7: #{discriminator_forward.1} parent=1 // pred_check_branch
      %19 = sbr.rel (0) target = $region9
    $region8: #{discriminator_forward.1} parent=1 // pred_region
      %21 = vsyncadd [#allocation4], 0
      %s22 = sshll.u32 %s1, 4
      %s23 = int_to_ptr.hbm [resolvable:$true] %s22
      %s24 = sshll.u32 [#allocation3], 4
      %s25 = int_to_ptr.vmem [resolvable:$true] %s24
      %30 = dma.hbm_to_vmem [thread:$0]  %s23, 25088, %s25, [#allocation4], 256, 256, 16
    $region9: #{discriminator_forward.1} parent=1 // pred_fallthru
      _
    // Predicated region
    $region10: #{discriminator_forward.1} parent=1 // pred_check
      _
    $region11: #{discriminator_forward.1} parent=1 // pred_check_branch
      %32 = sbr.rel (0) target = $region13
    $region12: #{discriminator_forward.1} parent=1 // pred_region
      _
    $region13: #{discriminator_forward.1} parent=1 // pred_fallthru
      _
    // Predicated region
    $region14: #{discriminator_forward.1} parent=1 // pred_check
      _
    $region15: #{discriminator_forward.1} parent=1 // pred_check_branch
      %34 = sbr.rel (0) target = $region17
    $region16: #{discriminator_forward.1} parent=1 // pred_region
      %36 = vsyncadd [#allocation6], 0
      %s37 = sshll.u32 %s3, 4
      %s38 = int_to_ptr.hbm [resolvable:$true] %s37
      %s39 = sshll.u32 [#allocation5], 4
      %s40 = int_to_ptr.vmem [resolvable:$true] %s39
      %45 = dma.hbm_to_vmem [thread:$0]  %s38, 8192, %s40, [#allocation6], 128, 128, 8
    $region17: #{discriminator_forward.1} parent=1 // pred_fallthru
      _
    // Predicated region
    $region18: #{discriminator_forward.1} parent=1 // pred_check
      _
    $region19: #{discriminator_forward.1} parent=1 // pred_check_branch
      %47 = sbr.rel (0) target = $region21
    $region20: #{discriminator_forward.1} parent=1 // pred_region
      _
    $region21: #{discriminator_forward.1} parent=1 // pred_fallthru
      _
    // Predicated region
    $region22: #{discriminator_forward.1} parent=1 // pred_check
      _
    $region23: #{discriminator_forward.1} parent=1 // pred_check_branch
      %49 = sbr.rel (0) target = $region25
    $region24: #{discriminator_forward.1} parent=1 // pred_region
      _
    $region25: #{discriminator_forward.1} parent=1 // pred_fallthru
      _
    // Predicated region
    $region26: #{discriminator_forward.1} parent=1 // pred_check
      _
    $region27: #{discriminator_forward.1} parent=1 // pred_check_branch
      %51 = sbr.rel (0) target = $region29
    $region28: #{discriminator_forward.1} parent=1 // pred_region
      _
    $region29: #{discriminator_forward.1} parent=1 // pred_fallthru
      _
    // Predicated region
    $region30: #{discriminator_forward.1} parent=1 // pred_check
      _
    $region31: #{discriminator_forward.1} parent=1 // pred_check_branch
      %53 = sbr.rel (0) target = $region33
    $region32: #{discriminator_forward.1} parent=1 // pred_region
      %55 = dma.done [#allocation4], 25088
    $region33: #{discriminator_forward.1} parent=1 // pred_fallthru
      _
    // Predicated region
    $region34: #{discriminator_forward.1} parent=1 // pred_check
      _
    $region35: #{discriminator_forward.1} parent=1 // pred_check_branch
      %57 = sbr.rel (0) target = $region37
    $region36: #{discriminator_forward.1} parent=1 // pred_region
      %59 = dma.done [#allocation6], 8192
    $region37: #{discriminator_forward.1} parent=1 // pred_fallthru
      _
    %v61 = vld [vmem:[%s0] sm:$0xff]
    %v62 = vld [vmem:[%s0 + $0x8] sm:$0xff]
    %v63 = vld [vmem:[%s0 + $0x10] sm:$0xff]
    %v64 = vld [vmem:[%s0 + $0x18] sm:$0xff]
    %v65 = vld [vmem:[%s0 + $0x20] sm:$0xff]
    %v66 = vld [vmem:[%s0 + $0x28] sm:$0xff]
    %v67 = vld [vmem:[%s0 + $0x30] sm:$0xff]
    %v68 = vld [vmem:[%s0 + $0x38] sm:$0xff]
    %v69 = vld [vmem:[%s0 + $0x40] sm:$0xff]
    %v70 = vld [vmem:[%s0 + $0x48] sm:$0xff]
    %v71 = vld [vmem:[%s0 + $0x50] sm:$0xff]
    %v72 = vld [vmem:[%s0 + $0x58] sm:$0xff]
    %v73 = vld [vmem:[%s0 + $0x60] sm:$0xff]
    %v74 = vld [vmem:[%s0 + $0x68] sm:$0xff]
    %v75 = vpack.c.bf16 %v68, %v61
    %v76 = vpack.c.bf16 %v69, %v62
    %v77 = vpack.c.bf16 %v70, %v63
    %v78 = vpack.c.bf16 %v71, %v64
    %v79 = vpack.c.bf16 %v72, %v65
    %v80 = vpack.c.bf16 %v73, %v66
    %v81 = vpack.c.bf16 %v74, %v67
    %v82 = vld [vmem:[#allocation3] sm:$0xff]
    %v83 = vld [vmem:[#allocation3 + $0x8] sm:$0xff]
    %v84 = vld [vmem:[#allocation3 + $0x10] sm:$0xff]
    %v85 = vld [vmem:[#allocation3 + $0x18] sm:$0xff]
    %v86 = vld [vmem:[#allocation3 + $0x20] sm:$0xff]
    %v87 = vld [vmem:[#allocation3 + $0x28] sm:$0xff]
    %v88 = vld [vmem:[#allocation3 + $0x30] sm:$0xff]
    %v89 = vld [vmem:[#allocation3 + $0x38] sm:$0xff]
    %v90 = vld [vmem:[#allocation3 + $0x40] sm:$0xff]
    %v91 = vld [vmem:[#allocation3 + $0x48] sm:$0xff]
    %v92 = vld [vmem:[#allocation3 + $0x50] sm:$0xff]
    %v93 = vld [vmem:[#allocation3 + $0x58] sm:$0xff]
    %v94 = vld [vmem:[#allocation3 + $0x60] sm:$0xff]
    %v95 = vld [vmem:[#allocation3 + $0x68] sm:$0xff]
    %v96 = vld [vmem:[#allocation3 + $0x70] sm:$0xff]
    %v97 = vld [vmem:[#allocation3 + $0x78] sm:$0xff]
    %v98 = vld [vmem:[#allocation3 + $0x80] sm:$0xff]
    %v99 = vld [vmem:[#allocation3 + $0x88] sm:$0xff]
    %v100 = vld [vmem:[#allocation3 + $0x90] sm:$0xff]
    %v101 = vld [vmem:[#allocation3 + $0x98] sm:$0xff]
    %v102 = vld [vmem:[#allocation3 + $0xa0] sm:$0xff]
    %v103 = vld [vmem:[#allocation3 + $0xa8] sm:$0xff]
    %v104 = vld [vmem:[#allocation3 + $0xb0] sm:$0xff]
    %v105 = vld [vmem:[#allocation3 + $0xb8] sm:$0xff]
    %v106 = vld [vmem:[#allocation3 + $0xc0] sm:$0xff]
    %v107 = vld [vmem:[#allocation3 + $0xc8] sm:$0xff]
    %v108 = vld [vmem:[#allocation3 + $0xd0] sm:$0xff]
    %v109 = vld [vmem:[#allocation3 + $0xd8] sm:$0xff]
    %v110 = vld [vmem:[#allocation3 + $0xe0] sm:$0xff]
    %v111 = vld [vmem:[#allocation3 + $0xe8] sm:$0xff]
    %v112 = vld [vmem:[#allocation3 + $0xf0] sm:$0xff]
    %v113 = vld [vmem:[#allocation3 + $0xf8] sm:$0xff]
    %v114 = vld [vmem:[#allocation3 + $0x100] sm:$0xff]
    %v115 = vld [vmem:[#allocation3 + $0x108] sm:$0xff]
    %v116 = vld [vmem:[#allocation3 + $0x110] sm:$0xff]
    %v117 = vld [vmem:[#allocation3 + $0x118] sm:$0xff]
    %v118 = vld [vmem:[#allocation3 + $0x120] sm:$0xff]
    %v119 = vld [vmem:[#allocation3 + $0x128] sm:$0xff]
    %v120 = vld [vmem:[#allocation3 + $0x130] sm:$0xff]
    %v121 = vld [vmem:[#allocation3 + $0x138] sm:$0xff]
    %v122 = vld [vmem:[#allocation3 + $0x140] sm:$0xff]
    %v123 = vld [vmem:[#allocation3 + $0x148] sm:$0xff]
    %v124 = vld [vmem:[#allocation3 + $0x150] sm:$0xff]
    %v125 = vld [vmem:[#allocation3 + $0x158] sm:$0xff]
    %v126 = vld [vmem:[#allocation3 + $0x160] sm:$0xff]
    %v127 = vld [vmem:[#allocation3 + $0x168] sm:$0xff]
    %v128 = vld [vmem:[#allocation3 + $0x170] sm:$0xff]
    %v129 = vld [vmem:[#allocation3 + $0x178] sm:$0xff]
    %v130 = vld [vmem:[#allocation3 + $0x180] sm:$0xff]
    %v131 = vld [vmem:[#allocation3 + $0x188] sm:$0xff]
    %v132 = vld [vmem:[#allocation3 + $0x190] sm:$0xff]
    %v133 = vld [vmem:[#allocation3 + $0x198] sm:$0xff]
    %v134 = vld [vmem:[#allocation3 + $0x1a0] sm:$0xff]
    %v135 = vld [vmem:[#allocation3 + $0x1a8] sm:$0xff]
    %v136 = vld [vmem:[#allocation3 + $0x1b0] sm:$0xff]
    %v137 = vld [vmem:[#allocation3 + $0x1b8] sm:$0xff]
    %v138 = vld [vmem:[#allocation3 + $0x1c0] sm:$0xff]
    %v139 = vld [vmem:[#allocation3 + $0x1c8] sm:$0xff]
    %v140 = vld [vmem:[#allocation3 + $0x1d0] sm:$0xff]
    %v141 = vld [vmem:[#allocation3 + $0x1d8] sm:$0xff]
    %v142 = vld [vmem:[#allocation3 + $0x1e0] sm:$0xff]
    %v143 = vld [vmem:[#allocation3 + $0x1e8] sm:$0xff]
    %v144 = vld [vmem:[#allocation3 + $0x1f0] sm:$0xff]
    %v145 = vld [vmem:[#allocation3 + $0x1f8] sm:$0xff]
    %v146 = vld [vmem:[#allocation3 + $0x200] sm:$0xff]
    %v147 = vld [vmem:[#allocation3 + $0x208] sm:$0xff]
    %v148 = vld [vmem:[#allocation3 + $0x210] sm:$0xff]
    %v149 = vld [vmem:[#allocation3 + $0x218] sm:$0xff]
    %v150 = vld [vmem:[#allocation3 + $0x220] sm:$0xff]
    %v151 = vld [vmem:[#allocation3 + $0x228] sm:$0xff]
    %v152 = vld [vmem:[#allocation3 + $0x230] sm:$0xff]
    %v153 = vld [vmem:[#allocation3 + $0x238] sm:$0xff]
    %v154 = vld [vmem:[#allocation3 + $0x240] sm:$0xff]
    %v155 = vld [vmem:[#allocation3 + $0x248] sm:$0xff]
    %v156 = vld [vmem:[#allocation3 + $0x250] sm:$0xff]
    %v157 = vld [vmem:[#allocation3 + $0x258] sm:$0xff]
    %v158 = vld [vmem:[#allocation3 + $0x260] sm:$0xff]
    %v159 = vld [vmem:[#allocation3 + $0x268] sm:$0xff]
    %v160 = vld [vmem:[#allocation3 + $0x270] sm:$0xff]
    %v161 = vld [vmem:[#allocation3 + $0x278] sm:$0xff]
    %v162 = vld [vmem:[#allocation3 + $0x280] sm:$0xff]
    %v163 = vld [vmem:[#allocation3 + $0x288] sm:$0xff]
    %v164 = vld [vmem:[#allocation3 + $0x290] sm:$0xff]
    %v165 = vld [vmem:[#allocation3 + $0x298] sm:$0xff]
    %v166 = vld [vmem:[#allocation3 + $0x2a0] sm:$0xff]
    %v167 = vld [vmem:[#allocation3 + $0x2a8] sm:$0xff]
    %v168 = vld [vmem:[#allocation3 + $0x2b0] sm:$0xff]
    %v169 = vld [vmem:[#allocation3 + $0x2b8] sm:$0xff]
    %v170 = vld [vmem:[#allocation3 + $0x2c0] sm:$0xff]
    %v171 = vld [vmem:[#allocation3 + $0x2c8] sm:$0xff]
    %v172 = vld [vmem:[#allocation3 + $0x2d0] sm:$0xff]
    %v173 = vld [vmem:[#allocation3 + $0x2d8] sm:$0xff]
    %v174 = vld [vmem:[#allocation3 + $0x2e0] sm:$0xff]
    %v175 = vld [vmem:[#allocation3 + $0x2e8] sm:$0xff]
    %v176 = vld [vmem:[#allocation3 + $0x2f0] sm:$0xff]
    %v177 = vld [vmem:[#allocation3 + $0x2f8] sm:$0xff]
    %v178 = vld [vmem:[#allocation3 + $0x300] sm:$0xff]
    %v179 = vld [vmem:[#allocation3 + $0x308] sm:$0xff]
    %v180 = vld [vmem:[#allocation3 + $0x310] sm:$0xff]
    %v181 = vld [vmem:[#allocation3 + $0x318] sm:$0xff]
    %v182 = vld [vmem:[#allocation3 + $0x320] sm:$0xff]
    %v183 = vld [vmem:[#allocation3 + $0x328] sm:$0xff]
    %v184 = vld [vmem:[#allocation3 + $0x330] sm:$0xff]
    %v185 = vld [vmem:[#allocation3 + $0x338] sm:$0xff]
    %v186 = vld [vmem:[#allocation3 + $0x340] sm:$0xff]
    %v187 = vld [vmem:[#allocation3 + $0x348] sm:$0xff]
    %v188 = vld [vmem:[#allocation3 + $0x350] sm:$0xff]
    %v189 = vld [vmem:[#allocation3 + $0x358] sm:$0xff]
    %v190 = vld [vmem:[#allocation3 + $0x360] sm:$0xff]
    %v191 = vld [vmem:[#allocation3 + $0x368] sm:$0xff]
    %v192 = vld [vmem:[#allocation3 + $0x370] sm:$0xff]
    %v193 = vld [vmem:[#allocation3 + $0x378] sm:$0xff]
    %v194 = vld [vmem:[#allocation3 + $0x380] sm:$0xff]
    %v195 = vld [vmem:[#allocation3 + $0x388] sm:$0xff]
    %v196 = vld [vmem:[#allocation3 + $0x390] sm:$0xff]
    %v197 = vld [vmem:[#allocation3 + $0x398] sm:$0xff]
    %v198 = vld [vmem:[#allocation3 + $0x3a0] sm:$0xff]
    %v199 = vld [vmem:[#allocation3 + $0x3a8] sm:$0xff]
    %v200 = vld [vmem:[#allocation3 + $0x3b0] sm:$0xff]
    %v201 = vld [vmem:[#allocation3 + $0x3b8] sm:$0xff]
    %v202 = vld [vmem:[#allocation3 + $0x3c0] sm:$0xff]
    %v203 = vld [vmem:[#allocation3 + $0x3c8] sm:$0xff]
    %v204 = vld [vmem:[#allocation3 + $0x3d0] sm:$0xff]
    %v205 = vld [vmem:[#allocation3 + $0x3d8] sm:$0xff]
    %v206 = vld [vmem:[#allocation3 + $0x3e0] sm:$0xff]
    %v207 = vld [vmem:[#allocation3 + $0x3e8] sm:$0xff]
    %v208 = vld [vmem:[#allocation3 + $0x3f0] sm:$0xff]
    %v209 = vld [vmem:[#allocation3 + $0x3f8] sm:$0xff]
    %v210 = vld [vmem:[#allocation3 + $0x400] sm:$0xff]
    %v211 = vld [vmem:[#allocation3 + $0x408] sm:$0xff]
    %v212 = vld [vmem:[#allocation3 + $0x410] sm:$0xff]
    %v213 = vld [vmem:[#allocation3 + $0x418] sm:$0xff]
    %v214 = vld [vmem:[#allocation3 + $0x420] sm:$0xff]
    %v215 = vld [vmem:[#allocation3 + $0x428] sm:$0xff]
    %v216 = vld [vmem:[#allocation3 + $0x430] sm:$0xff]
    %v217 = vld [vmem:[#allocation3 + $0x438] sm:$0xff]
    %v218 = vld [vmem:[#allocation3 + $0x440] sm:$0xff]
    %v219 = vld [vmem:[#allocation3 + $0x448] sm:$0xff]
    %v220 = vld [vmem:[#allocation3 + $0x450] sm:$0xff]
    %v221 = vld [vmem:[#allocation3 + $0x458] sm:$0xff]
    %v222 = vld [vmem:[#allocation3 + $0x460] sm:$0xff]
    %v223 = vld [vmem:[#allocation3 + $0x468] sm:$0xff]
    %v224 = vld [vmem:[#allocation3 + $0x470] sm:$0xff]
    %v225 = vld [vmem:[#allocation3 + $0x478] sm:$0xff]
    %v226 = vld [vmem:[#allocation3 + $0x480] sm:$0xff]
    %v227 = vld [vmem:[#allocation3 + $0x488] sm:$0xff]
    %v228 = vld [vmem:[#allocation3 + $0x490] sm:$0xff]
    %v229 = vld [vmem:[#allocation3 + $0x498] sm:$0xff]
    %v230 = vld [vmem:[#allocation3 + $0x4a0] sm:$0xff]
    %v231 = vld [vmem:[#allocation3 + $0x4a8] sm:$0xff]
    %v232 = vld [vmem:[#allocation3 + $0x4b0] sm:$0xff]
    %v233 = vld [vmem:[#allocation3 + $0x4b8] sm:$0xff]
    %v234 = vld [vmem:[#allocation3 + $0x4c0] sm:$0xff]
    %v235 = vld [vmem:[#allocation3 + $0x4c8] sm:$0xff]
    %v236 = vld [vmem:[#allocation3 + $0x4d0] sm:$0xff]
    %v237 = vld [vmem:[#allocation3 + $0x4d8] sm:$0xff]
    %v238 = vld [vmem:[#allocation3 + $0x4e0] sm:$0xff]
    %v239 = vld [vmem:[#allocation3 + $0x4e8] sm:$0xff]
    %v240 = vld [vmem:[#allocation3 + $0x4f0] sm:$0xff]
    %v241 = vld [vmem:[#allocation3 + $0x4f8] sm:$0xff]
    %v242 = vld [vmem:[#allocation3 + $0x500] sm:$0xff]
    %v243 = vld [vmem:[#allocation3 + $0x508] sm:$0xff]
    %v244 = vld [vmem:[#allocation3 + $0x510] sm:$0xff]
    %v245 = vld [vmem:[#allocation3 + $0x518] sm:$0xff]
    %v246 = vld [vmem:[#allocation3 + $0x520] sm:$0xff]
    %v247 = vld [vmem:[#allocation3 + $0x528] sm:$0xff]
    %v248 = vld [vmem:[#allocation3 + $0x530] sm:$0xff]
    %v249 = vld [vmem:[#allocation3 + $0x538] sm:$0xff]
    %v250 = vld [vmem:[#allocation3 + $0x540] sm:$0xff]
    %v251 = vld [vmem:[#allocation3 + $0x548] sm:$0xff]
    %v252 = vld [vmem:[#allocation3 + $0x550] sm:$0xff]
    %v253 = vld [vmem:[#allocation3 + $0x558] sm:$0xff]
    %v254 = vld [vmem:[#allocation3 + $0x560] sm:$0xff]
    %v255 = vld [vmem:[#allocation3 + $0x568] sm:$0xff]
    %v256 = vld [vmem:[#allocation3 + $0x570] sm:$0xff]
    %v257 = vld [vmem:[#allocation3 + $0x578] sm:$0xff]
    %v258 = vld [vmem:[#allocation3 + $0x580] sm:$0xff]
    %v259 = vld [vmem:[#allocation3 + $0x588] sm:$0xff]
    %v260 = vld [vmem:[#allocation3 + $0x590] sm:$0xff]
    %v261 = vld [vmem:[#allocation3 + $0x598] sm:$0xff]
    %v262 = vld [vmem:[#allocation3 + $0x5a0] sm:$0xff]
    %v263 = vld [vmem:[#allocation3 + $0x5a8] sm:$0xff]
    %v264 = vld [vmem:[#allocation3 + $0x5b0] sm:$0xff]
    %v265 = vld [vmem:[#allocation3 + $0x5b8] sm:$0xff]
    %v266 = vld [vmem:[#allocation3 + $0x5c0] sm:$0xff]
    %v267 = vld [vmem:[#allocation3 + $0x5c8] sm:$0xff]
    %v268 = vld [vmem:[#allocation3 + $0x5d0] sm:$0xff]
    %v269 = vld [vmem:[#allocation3 + $0x5d8] sm:$0xff]
    %v270 = vld [vmem:[#allocation3 + $0x5e0] sm:$0xff]
    %v271 = vld [vmem:[#allocation3 + $0x5e8] sm:$0xff]
    %v272 = vld [vmem:[#allocation3 + $0x5f0] sm:$0xff]
    %v273 = vld [vmem:[#allocation3 + $0x5f8] sm:$0xff]
    %v274 = vld [vmem:[#allocation3 + $0x600] sm:$0xff]
    %v275 = vld [vmem:[#allocation3 + $0x608] sm:$0xff]
    %v276 = vld [vmem:[#allocation3 + $0x610] sm:$0xff]
    %v277 = vld [vmem:[#allocation3 + $0x618] sm:$0xff]
    %v278 = vld [vmem:[%s2] sm:$0xf]
    %v280 = vperm.slane %v278, 0
    %v281 = vperm.slane %v278, 1
    %v282 = vperm.slane %v278, 2
    %v283 = vperm.slane %v278, 3
    %v484 = vunpack.c.l.b16 %v82
    %v485 = vunpack.c.h.b16 %v82
    %v486 = vunpack.c.l.b16 %v83
    %v487 = vunpack.c.h.b16 %v83
    %v488 = vunpack.c.l.b16 %v84
    %v489 = vunpack.c.h.b16 %v84
    %v490 = vunpack.c.l.b16 %v85
    %v491 = vunpack.c.h.b16 %v85
    %v492 = vunpack.c.l.b16 %v86
    %v493 = vunpack.c.h.b16 %v86
    %v494 = vunpack.c.l.b16 %v87
    %v495 = vunpack.c.h.b16 %v87
    %v496 = vunpack.c.l.b16 %v88
    %v497 = vunpack.c.h.b16 %v88
    %v498 = vunpack.c.l.b16 %v89
    %v499 = vunpack.c.h.b16 %v89
    %v500 = vunpack.c.l.b16 %v90
    %v501 = vunpack.c.h.b16 %v90
    %v502 = vunpack.c.l.b16 %v91
    %v503 = vunpack.c.h.b16 %v91
    %v504 = vunpack.c.l.b16 %v92
    %v505 = vunpack.c.h.b16 %v92
    %v506 = vunpack.c.l.b16 %v93
    %v507 = vunpack.c.h.b16 %v93
    %v508 = vunpack.c.l.b16 %v94
    %v509 = vunpack.c.h.b16 %v94
    %v510 = vunpack.c.l.b16 %v95
    %v511 = vunpack.c.h.b16 %v95
    %v512 = vunpack.c.l.b16 %v96
    %v513 = vunpack.c.h.b16 %v96
    %v514 = vunpack.c.l.b16 %v97
    %v515 = vunpack.c.h.b16 %v97
    %v516 = vunpack.c.l.b16 %v98
    %v517 = vunpack.c.h.b16 %v98
    %v518 = vunpack.c.l.b16 %v99
    %v519 = vunpack.c.h.b16 %v99
    %v520 = vunpack.c.l.b16 %v100
    %v521 = vunpack.c.h.b16 %v100
    %v522 = vunpack.c.l.b16 %v101
    %v523 = vunpack.c.h.b16 %v101
    %v524 = vunpack.c.l.b16 %v102
    %v525 = vunpack.c.h.b16 %v102
    %v526 = vunpack.c.l.b16 %v103
    %v527 = vunpack.c.h.b16 %v103
    %v528 = vunpack.c.l.b16 %v104
    %v529 = vunpack.c.h.b16 %v104
    %v530 = vunpack.c.l.b16 %v105
    %v531 = vunpack.c.h.b16 %v105
    %v532 = vunpack.c.l.b16 %v106
    %v533 = vunpack.c.h.b16 %v106
    %v534 = vunpack.c.l.b16 %v107
    %v535 = vunpack.c.h.b16 %v107
    %v536 = vunpack.c.l.b16 %v108
    %v537 = vunpack.c.h.b16 %v108
    %v538 = vunpack.c.l.b16 %v109
    %v539 = vunpack.c.h.b16 %v109
    %v540 = vunpack.c.l.b16 %v110
    %v541 = vunpack.c.h.b16 %v110
    %v542 = vunpack.c.l.b16 %v111
    %v543 = vunpack.c.h.b16 %v111
    %v544 = vunpack.c.l.b16 %v112
    %v545 = vunpack.c.h.b16 %v112
    %v546 = vunpack.c.l.b16 %v113
    %v547 = vunpack.c.h.b16 %v113
    %v548 = vunpack.c.l.b16 %v114
    %v549 = vunpack.c.h.b16 %v114
    %v550 = vunpack.c.l.b16 %v115
    %v551 = vunpack.c.h.b16 %v115
    %v552 = vunpack.c.l.b16 %v116
    %v553 = vunpack.c.h.b16 %v116
    %v554 = vunpack.c.l.b16 %v117
    %v555 = vunpack.c.h.b16 %v117
    %v556 = vunpack.c.l.b16 %v118
    %v557 = vunpack.c.h.b16 %v118
    %v558 = vunpack.c.l.b16 %v119
    %v559 = vunpack.c.h.b16 %v119
    %v560 = vunpack.c.l.b16 %v120
    %v561 = vunpack.c.h.b16 %v120
    %v562 = vunpack.c.l.b16 %v121
    %v563 = vunpack.c.h.b16 %v121
    %v564 = vunpack.c.l.b16 %v122
    %v565 = vunpack.c.h.b16 %v122
    %v566 = vunpack.c.l.b16 %v123
    %v567 = vunpack.c.h.b16 %v123
    %v568 = vunpack.c.l.b16 %v124
    %v569 = vunpack.c.h.b16 %v124
    %v570 = vunpack.c.l.b16 %v125
    %v571 = vunpack.c.h.b16 %v125
    %v572 = vunpack.c.l.b16 %v126
    %v573 = vunpack.c.h.b16 %v126
    %v574 = vunpack.c.l.b16 %v127
    %v575 = vunpack.c.h.b16 %v127
    %v576 = vunpack.c.l.b16 %v128
    %v577 = vunpack.c.h.b16 %v128
    %v578 = vunpack.c.l.b16 %v129
    %v579 = vunpack.c.h.b16 %v129
    %v580 = vunpack.c.l.b16 %v130
    %v581 = vunpack.c.h.b16 %v130
    %v582 = vunpack.c.l.b16 %v131
    %v583 = vunpack.c.h.b16 %v131
    %v584 = vunpack.c.l.b16 %v132
    %v585 = vunpack.c.h.b16 %v132
    %v586 = vunpack.c.l.b16 %v133
    %v587 = vunpack.c.h.b16 %v133
    %v588 = vunpack.c.l.b16 %v134
    %v589 = vunpack.c.h.b16 %v134
    %v590 = vunpack.c.l.b16 %v135
    %v591 = vunpack.c.h.b16 %v135
    %v592 = vunpack.c.l.b16 %v136
    %v593 = vunpack.c.h.b16 %v136
    %v594 = vunpack.c.l.b16 %v137
    %v595 = vunpack.c.h.b16 %v137
    %v596 = vunpack.c.l.b16 %v138
    %v597 = vunpack.c.h.b16 %v138
    %v598 = vunpack.c.l.b16 %v139
    %v599 = vunpack.c.h.b16 %v139
    %v600 = vunpack.c.l.b16 %v140
    %v601 = vunpack.c.h.b16 %v140
    %v602 = vunpack.c.l.b16 %v141
    %v603 = vunpack.c.h.b16 %v141
    %v604 = vunpack.c.l.b16 %v142
    %v605 = vunpack.c.h.b16 %v142
    %v606 = vunpack.c.l.b16 %v143
    %v607 = vunpack.c.h.b16 %v143
    %v608 = vunpack.c.l.b16 %v144
    %v609 = vunpack.c.h.b16 %v144
    %v610 = vunpack.c.l.b16 %v145
    %v611 = vunpack.c.h.b16 %v145
    %v612 = vunpack.c.l.b16 %v146
    %v613 = vunpack.c.h.b16 %v146
    %v614 = vunpack.c.l.b16 %v147
    %v615 = vunpack.c.h.b16 %v147
    %v616 = vunpack.c.l.b16 %v148
    %v617 = vunpack.c.h.b16 %v148
    %v618 = vunpack.c.l.b16 %v149
    %v619 = vunpack.c.h.b16 %v149
    %v620 = vunpack.c.l.b16 %v150
    %v621 = vunpack.c.h.b16 %v150
    %v622 = vunpack.c.l.b16 %v151
    %v623 = vunpack.c.h.b16 %v151
    %v624 = vunpack.c.l.b16 %v152
    %v625 = vunpack.c.h.b16 %v152
    %v626 = vunpack.c.l.b16 %v153
    %v627 = vunpack.c.h.b16 %v153
    %v628 = vunpack.c.l.b16 %v154
    %v629 = vunpack.c.h.b16 %v154
    %v630 = vunpack.c.l.b16 %v155
    %v631 = vunpack.c.h.b16 %v155
    %v632 = vunpack.c.l.b16 %v156
    %v633 = vunpack.c.h.b16 %v156
    %v634 = vunpack.c.l.b16 %v157
    %v635 = vunpack.c.h.b16 %v157
    %v636 = vunpack.c.l.b16 %v158
    %v637 = vunpack.c.h.b16 %v158
    %v638 = vunpack.c.l.b16 %v159
    %v639 = vunpack.c.h.b16 %v159
    %v640 = vunpack.c.l.b16 %v160
    %v641 = vunpack.c.h.b16 %v160
    %v642 = vunpack.c.l.b16 %v161
    %v643 = vunpack.c.h.b16 %v161
    %v644 = vunpack.c.l.b16 %v162
    %v645 = vunpack.c.h.b16 %v162
    %v646 = vunpack.c.l.b16 %v163
    %v647 = vunpack.c.h.b16 %v163
    %v648 = vunpack.c.l.b16 %v164
    %v649 = vunpack.c.h.b16 %v164
    %v650 = vunpack.c.l.b16 %v165
    %v651 = vunpack.c.h.b16 %v165
    %v652 = vunpack.c.l.b16 %v166
    %v653 = vunpack.c.h.b16 %v166
    %v654 = vunpack.c.l.b16 %v167
    %v655 = vunpack.c.h.b16 %v167
    %v656 = vunpack.c.l.b16 %v168
    %v657 = vunpack.c.h.b16 %v168
    %v658 = vunpack.c.l.b16 %v169
    %v659 = vunpack.c.h.b16 %v169
    %v660 = vunpack.c.l.b16 %v170
    %v661 = vunpack.c.h.b16 %v170
    %v662 = vunpack.c.l.b16 %v171
    %v663 = vunpack.c.h.b16 %v171
    %v664 = vunpack.c.l.b16 %v172
    %v665 = vunpack.c.h.b16 %v172
    %v666 = vunpack.c.l.b16 %v173
    %v667 = vunpack.c.h.b16 %v173
    %v668 = vunpack.c.l.b16 %v174
    %v669 = vunpack.c.h.b16 %v174
    %v670 = vunpack.c.l.b16 %v175
    %v671 = vunpack.c.h.b16 %v175
    %v672 = vunpack.c.l.b16 %v176
    %v673 = vunpack.c.h.b16 %v176
    %v674 = vunpack.c.l.b16 %v177
    %v675 = vunpack.c.h.b16 %v177
    %v676 = vunpack.c.l.b16 %v178
    %v677 = vunpack.c.h.b16 %v178
    %v678 = vunpack.c.l.b16 %v179
    %v679 = vunpack.c.h.b16 %v179
    %v680 = vunpack.c.l.b16 %v180
    %v681 = vunpack.c.h.b16 %v180
    %v682 = vunpack.c.l.b16 %v181
    %v683 = vunpack.c.h.b16 %v181
    %v684 = vunpack.c.l.b16 %v182
    %v685 = vunpack.c.h.b16 %v182
    %v686 = vunpack.c.l.b16 %v183
    %v687 = vunpack.c.h.b16 %v183
    %v688 = vunpack.c.l.b16 %v184
    %v689 = vunpack.c.h.b16 %v184
    %v690 = vunpack.c.l.b16 %v185
    %v691 = vunpack.c.h.b16 %v185
    %v692 = vunpack.c.l.b16 %v186
    %v693 = vunpack.c.h.b16 %v186
    %v694 = vunpack.c.l.b16 %v187
    %v695 = vunpack.c.h.b16 %v187
    %v696 = vunpack.c.l.b16 %v188
    %v697 = vunpack.c.h.b16 %v188
    %v698 = vunpack.c.l.b16 %v189
    %v699 = vunpack.c.h.b16 %v189
    %v700 = vunpack.c.l.b16 %v190
    %v701 = vunpack.c.h.b16 %v190
    %v702 = vunpack.c.l.b16 %v191
    %v703 = vunpack.c.h.b16 %v191
    %v704 = vunpack.c.l.b16 %v192
    %v705 = vunpack.c.h.b16 %v192
    %v706 = vunpack.c.l.b16 %v193
    %v707 = vunpack.c.h.b16 %v193
    %v708 = vunpack.c.l.b16 %v194
    %v709 = vunpack.c.h.b16 %v194
    %v710 = vunpack.c.l.b16 %v195
    %v711 = vunpack.c.h.b16 %v195
    %v712 = vunpack.c.l.b16 %v196
    %v713 = vunpack.c.h.b16 %v196
    %v714 = vunpack.c.l.b16 %v197
    %v715 = vunpack.c.h.b16 %v197
    %v716 = vunpack.c.l.b16 %v198
    %v717 = vunpack.c.h.b16 %v198
    %v718 = vunpack.c.l.b16 %v199
    %v719 = vunpack.c.h.b16 %v199
    %v720 = vunpack.c.l.b16 %v200
    %v721 = vunpack.c.h.b16 %v200
    %v722 = vunpack.c.l.b16 %v201
    %v723 = vunpack.c.h.b16 %v201
    %v724 = vunpack.c.l.b16 %v202
    %v725 = vunpack.c.h.b16 %v202
    %v726 = vunpack.c.l.b16 %v203
    %v727 = vunpack.c.h.b16 %v203
    %v728 = vunpack.c.l.b16 %v204
    %v729 = vunpack.c.h.b16 %v204
    %v730 = vunpack.c.l.b16 %v205
    %v731 = vunpack.c.h.b16 %v205
    %v732 = vunpack.c.l.b16 %v206
    %v733 = vunpack.c.h.b16 %v206
    %v734 = vunpack.c.l.b16 %v207
    %v735 = vunpack.c.h.b16 %v207
    %v736 = vunpack.c.l.b16 %v208
    %v737 = vunpack.c.h.b16 %v208
    %v738 = vunpack.c.l.b16 %v209
    %v739 = vunpack.c.h.b16 %v209
    %v740 = vunpack.c.l.b16 %v210
    %v741 = vunpack.c.h.b16 %v210
    %v742 = vunpack.c.l.b16 %v211
    %v743 = vunpack.c.h.b16 %v211
    %v744 = vunpack.c.l.b16 %v212
    %v745 = vunpack.c.h.b16 %v212
    %v746 = vunpack.c.l.b16 %v213
    %v747 = vunpack.c.h.b16 %v213
    %v748 = vunpack.c.l.b16 %v214
    %v749 = vunpack.c.h.b16 %v214
    %v750 = vunpack.c.l.b16 %v215
    %v751 = vunpack.c.h.b16 %v215
    %v752 = vunpack.c.l.b16 %v216
    %v753 = vunpack.c.h.b16 %v216
    %v754 = vunpack.c.l.b16 %v217
    %v755 = vunpack.c.h.b16 %v217
    %v756 = vunpack.c.l.b16 %v218
    %v757 = vunpack.c.h.b16 %v218
    %v758 = vunpack.c.l.b16 %v219
    %v759 = vunpack.c.h.b16 %v219
    %v760 = vunpack.c.l.b16 %v220
    %v761 = vunpack.c.h.b16 %v220
    %v762 = vunpack.c.l.b16 %v221
    %v763 = vunpack.c.h.b16 %v221
    %v764 = vunpack.c.l.b16 %v222
    %v765 = vunpack.c.h.b16 %v222
    %v766 = vunpack.c.l.b16 %v223
    %v767 = vunpack.c.h.b16 %v223
    %v768 = vunpack.c.l.b16 %v224
    %v769 = vunpack.c.h.b16 %v224
    %v770 = vunpack.c.l.b16 %v225
    %v771 = vunpack.c.h.b16 %v225
    %v772 = vunpack.c.l.b16 %v226
    %v773 = vunpack.c.h.b16 %v226
    %v774 = vunpack.c.l.b16 %v227
    %v775 = vunpack.c.h.b16 %v227
    %v776 = vunpack.c.l.b16 %v228
    %v777 = vunpack.c.h.b16 %v228
    %v778 = vunpack.c.l.b16 %v229
    %v779 = vunpack.c.h.b16 %v229
    %v780 = vunpack.c.l.b16 %v230
    %v781 = vunpack.c.h.b16 %v230
    %v782 = vunpack.c.l.b16 %v231
    %v783 = vunpack.c.h.b16 %v231
    %v784 = vunpack.c.l.b16 %v232
    %v785 = vunpack.c.h.b16 %v232
    %v786 = vunpack.c.l.b16 %v233
    %v787 = vunpack.c.h.b16 %v233
    %v788 = vunpack.c.l.b16 %v234
    %v789 = vunpack.c.h.b16 %v234
    %v790 = vunpack.c.l.b16 %v235
    %v791 = vunpack.c.h.b16 %v235
    %v792 = vunpack.c.l.b16 %v236
    %v793 = vunpack.c.h.b16 %v236
    %v794 = vunpack.c.l.b16 %v237
    %v795 = vunpack.c.h.b16 %v237
    %v796 = vunpack.c.l.b16 %v238
    %v797 = vunpack.c.h.b16 %v238
    %v798 = vunpack.c.l.b16 %v239
    %v799 = vunpack.c.h.b16 %v239
    %v800 = vunpack.c.l.b16 %v240
    %v801 = vunpack.c.h.b16 %v240
    %v802 = vunpack.c.l.b16 %v241
    %v803 = vunpack.c.h.b16 %v241
    %v804 = vunpack.c.l.b16 %v242
    %v805 = vunpack.c.h.b16 %v242
    %v806 = vunpack.c.l.b16 %v243
    %v807 = vunpack.c.h.b16 %v243
    %v808 = vunpack.c.l.b16 %v244
    %v809 = vunpack.c.h.b16 %v244
    %v810 = vunpack.c.l.b16 %v245
    %v811 = vunpack.c.h.b16 %v245
    %v812 = vunpack.c.l.b16 %v246
    %v813 = vunpack.c.h.b16 %v246
    %v814 = vunpack.c.l.b16 %v247
    %v815 = vunpack.c.h.b16 %v247
    %v816 = vunpack.c.l.b16 %v248
    %v817 = vunpack.c.h.b16 %v248
    %v818 = vunpack.c.l.b16 %v249
    %v819 = vunpack.c.h.b16 %v249
    %v820 = vunpack.c.l.b16 %v250
    %v821 = vunpack.c.h.b16 %v250
    %v822 = vunpack.c.l.b16 %v251
    %v823 = vunpack.c.h.b16 %v251
    %v824 = vunpack.c.l.b16 %v252
    %v825 = vunpack.c.h.b16 %v252
    %v826 = vunpack.c.l.b16 %v253
    %v827 = vunpack.c.h.b16 %v253
    %v828 = vunpack.c.l.b16 %v254
    %v829 = vunpack.c.h.b16 %v254
    %v830 = vunpack.c.l.b16 %v255
    %v831 = vunpack.c.h.b16 %v255
    %v832 = vunpack.c.l.b16 %v256
    %v833 = vunpack.c.h.b16 %v256
    %v834 = vunpack.c.l.b16 %v257
    %v835 = vunpack.c.h.b16 %v257
    %v836 = vunpack.c.l.b16 %v258
    %v837 = vunpack.c.h.b16 %v258
    %v838 = vunpack.c.l.b16 %v259
    %v839 = vunpack.c.h.b16 %v259
    %v840 = vunpack.c.l.b16 %v260
    %v841 = vunpack.c.h.b16 %v260
    %v842 = vunpack.c.l.b16 %v261
    %v843 = vunpack.c.h.b16 %v261
    %v844 = vunpack.c.l.b16 %v262
    %v845 = vunpack.c.h.b16 %v262
    %v846 = vunpack.c.l.b16 %v263
    %v847 = vunpack.c.h.b16 %v263
    %v848 = vunpack.c.l.b16 %v264
    %v849 = vunpack.c.h.b16 %v264
    %v850 = vunpack.c.l.b16 %v265
    %v851 = vunpack.c.h.b16 %v265
    %v852 = vunpack.c.l.b16 %v266
    %v853 = vunpack.c.h.b16 %v266
    %v854 = vunpack.c.l.b16 %v267
    %v855 = vunpack.c.h.b16 %v267
    %v856 = vunpack.c.l.b16 %v268
    %v857 = vunpack.c.h.b16 %v268
    %v858 = vunpack.c.l.b16 %v269
    %v859 = vunpack.c.h.b16 %v269
    %v860 = vunpack.c.l.b16 %v270
    %v861 = vunpack.c.h.b16 %v270
    %v862 = vunpack.c.l.b16 %v271
    %v863 = vunpack.c.h.b16 %v271
    %v864 = vunpack.c.l.b16 %v272
    %v865 = vunpack.c.h.b16 %v272
    %v866 = vunpack.c.l.b16 %v273
    %v867 = vunpack.c.h.b16 %v273
    %v868 = vunpack.c.l.b16 %v274
    %v869 = vunpack.c.h.b16 %v274
    %v870 = vunpack.c.l.b16 %v275
    %v871 = vunpack.c.h.b16 %v275
    %v872 = vunpack.c.l.b16 %v276
    %v873 = vunpack.c.h.b16 %v276
    %v874 = vunpack.c.l.b16 %v277
    %v875 = vunpack.c.h.b16 %v277
    %v876 = vpack.c.b16 %v488, %v484
    %v877 = vpack.c.b16 %v489, %v485
    %v878 = vpack.c.b16 %v490, %v486
    %v879 = vpack.c.b16 %v491, %v487
    %v880 = vpack.c.b16 %v496, %v492
    %v881 = vpack.c.b16 %v497, %v493
    %v882 = vpack.c.b16 %v498, %v494
    %v883 = vpack.c.b16 %v499, %v495
    %v884 = vpack.c.b16 %v504, %v500
    %v885 = vpack.c.b16 %v505, %v501
    %v886 = vpack.c.b16 %v506, %v502
    %v887 = vpack.c.b16 %v507, %v503
    %v888 = vpack.c.b16 %v512, %v508
    %v889 = vpack.c.b16 %v513, %v509
    %v890 = vpack.c.b16 %v514, %v510
    %v891 = vpack.c.b16 %v515, %v511
    %v892 = vpack.c.b16 %v520, %v516
    %v893 = vpack.c.b16 %v521, %v517
    %v894 = vpack.c.b16 %v522, %v518
    %v895 = vpack.c.b16 %v523, %v519
    %v896 = vpack.c.b16 %v528, %v524
    %v897 = vpack.c.b16 %v529, %v525
    %v898 = vpack.c.b16 %v530, %v526
    %v899 = vpack.c.b16 %v531, %v527
    %v900 = vpack.c.b16 %v536, %v532
    %v901 = vpack.c.b16 %v537, %v533
    %v902 = vpack.c.b16 %v538, %v534
    %v903 = vpack.c.b16 %v539, %v535
    %v904 = vpack.c.b16 %v544, %v540
    %v905 = vpack.c.b16 %v545, %v541
    %v906 = vpack.c.b16 %v546, %v542
    %v907 = vpack.c.b16 %v547, %v543
    %v908 = vpack.c.b16 %v552, %v548
    %v909 = vpack.c.b16 %v553, %v549
    %v910 = vpack.c.b16 %v554, %v550
    %v911 = vpack.c.b16 %v555, %v551
    %v912 = vpack.c.b16 %v560, %v556
    %v913 = vpack.c.b16 %v561, %v557
    %v914 = vpack.c.b16 %v562, %v558
    %v915 = vpack.c.b16 %v563, %v559
    %v916 = vpack.c.b16 %v568, %v564
    %v917 = vpack.c.b16 %v569, %v565
    %v918 = vpack.c.b16 %v570, %v566
    %v919 = vpack.c.b16 %v571, %v567
    %v920 = vpack.c.b16 %v576, %v572
    %v921 = vpack.c.b16 %v577, %v573
    %v922 = vpack.c.b16 %v578, %v574
    %v923 = vpack.c.b16 %v579, %v575
    %v924 = vpack.c.b16 %v584, %v580
    %v925 = vpack.c.b16 %v585, %v581
    %v926 = vpack.c.b16 %v586, %v582
    %v927 = vpack.c.b16 %v587, %v583
    %v928 = vpack.c.b16 %v592, %v588
    %v929 = vpack.c.b16 %v593, %v589
    %v930 = vpack.c.b16 %v594, %v590
    %v931 = vpack.c.b16 %v595, %v591
    %v932 = vpack.c.b16 %v600, %v596
    %v933 = vpack.c.b16 %v601, %v597
    %v934 = vpack.c.b16 %v602, %v598
    %v935 = vpack.c.b16 %v603, %v599
    %v936 = vpack.c.b16 %v608, %v604
    %v937 = vpack.c.b16 %v609, %v605
    %v938 = vpack.c.b16 %v610, %v606
    %v939 = vpack.c.b16 %v611, %v607
    %v940 = vpack.c.b16 %v616, %v612
    %v941 = vpack.c.b16 %v617, %v613
    %v942 = vpack.c.b16 %v618, %v614
    %v943 = vpack.c.b16 %v619, %v615
    %v944 = vpack.c.b16 %v624, %v620
    %v945 = vpack.c.b16 %v625, %v621
    %v946 = vpack.c.b16 %v626, %v622
    %v947 = vpack.c.b16 %v627, %v623
    %v948 = vpack.c.b16 %v632, %v628
    %v949 = vpack.c.b16 %v633, %v629
    %v950 = vpack.c.b16 %v634, %v630
    %v951 = vpack.c.b16 %v635, %v631
    %v952 = vpack.c.b16 %v640, %v636
    %v953 = vpack.c.b16 %v641, %v637
    %v954 = vpack.c.b16 %v642, %v638
    %v955 = vpack.c.b16 %v643, %v639
    %v956 = vpack.c.b16 %v648, %v644
    %v957 = vpack.c.b16 %v649, %v645
    %v958 = vpack.c.b16 %v650, %v646
    %v959 = vpack.c.b16 %v651, %v647
    %v960 = vpack.c.b16 %v656, %v652
    %v961 = vpack.c.b16 %v657, %v653
    %v962 = vpack.c.b16 %v658, %v654
    %v963 = vpack.c.b16 %v659, %v655
    %v964 = vpack.c.b16 %v664, %v660
    %v965 = vpack.c.b16 %v665, %v661
    %v966 = vpack.c.b16 %v666, %v662
    %v967 = vpack.c.b16 %v667, %v663
    %v968 = vpack.c.b16 %v672, %v668
    %v969 = vpack.c.b16 %v673, %v669
    %v970 = vpack.c.b16 %v674, %v670
    %v971 = vpack.c.b16 %v675, %v671
    %v972 = vpack.c.b16 %v680, %v676
    %v973 = vpack.c.b16 %v681, %v677
    %v974 = vpack.c.b16 %v682, %v678
    %v975 = vpack.c.b16 %v683, %v679
    %v976 = vpack.c.b16 %v688, %v684
    %v977 = vpack.c.b16 %v689, %v685
    %v978 = vpack.c.b16 %v690, %v686
    %v979 = vpack.c.b16 %v691, %v687
    %v980 = vpack.c.b16 %v696, %v692
    %v981 = vpack.c.b16 %v697, %v693
    %v982 = vpack.c.b16 %v698, %v694
    %v983 = vpack.c.b16 %v699, %v695
    %v984 = vpack.c.b16 %v704, %v700
    %v985 = vpack.c.b16 %v705, %v701
    %v986 = vpack.c.b16 %v706, %v702
    %v987 = vpack.c.b16 %v707, %v703
    %v988 = vpack.c.b16 %v712, %v708
    %v989 = vpack.c.b16 %v713, %v709
    %v990 = vpack.c.b16 %v714, %v710
    %v991 = vpack.c.b16 %v715, %v711
    %v992 = vpack.c.b16 %v720, %v716
    %v993 = vpack.c.b16 %v721, %v717
    %v994 = vpack.c.b16 %v722, %v718
    %v995 = vpack.c.b16 %v723, %v719
    %v996 = vpack.c.b16 %v728, %v724
    %v997 = vpack.c.b16 %v729, %v725
    %v998 = vpack.c.b16 %v730, %v726
    %v999 = vpack.c.b16 %v731, %v727
    %v1000 = vpack.c.b16 %v736, %v732
    %v1001 = vpack.c.b16 %v737, %v733
    %v1002 = vpack.c.b16 %v738, %v734
    %v1003 = vpack.c.b16 %v739, %v735
    %v1004 = vpack.c.b16 %v744, %v740
    %v1005 = vpack.c.b16 %v745, %v741
    %v1006 = vpack.c.b16 %v746, %v742
    %v1007 = vpack.c.b16 %v747, %v743
    %v1008 = vpack.c.b16 %v752, %v748
    %v1009 = vpack.c.b16 %v753, %v749
    %v1010 = vpack.c.b16 %v754, %v750
    %v1011 = vpack.c.b16 %v755, %v751
    %v1012 = vpack.c.b16 %v760, %v756
    %v1013 = vpack.c.b16 %v761, %v757
    %v1014 = vpack.c.b16 %v762, %v758
    %v1015 = vpack.c.b16 %v763, %v759
    %v1016 = vpack.c.b16 %v768, %v764
    %v1017 = vpack.c.b16 %v769, %v765
    %v1018 = vpack.c.b16 %v770, %v766
    %v1019 = vpack.c.b16 %v771, %v767
    %v1020 = vpack.c.b16 %v776, %v772
    %v1021 = vpack.c.b16 %v777, %v773
    %v1022 = vpack.c.b16 %v778, %v774
    %v1023 = vpack.c.b16 %v779, %v775
    %v1024 = vpack.c.b16 %v784, %v780
    %v1025 = vpack.c.b16 %v785, %v781
    %v1026 = vpack.c.b16 %v786, %v782
    %v1027 = vpack.c.b16 %v787, %v783
    %v1028 = vpack.c.b16 %v792, %v788
    %v1029 = vpack.c.b16 %v793, %v789
    %v1030 = vpack.c.b16 %v794, %v790
    %v1031 = vpack.c.b16 %v795, %v791
    %v1032 = vpack.c.b16 %v800, %v796
    %v1033 = vpack.c.b16 %v801, %v797
    %v1034 = vpack.c.b16 %v802, %v798
    %v1035 = vpack.c.b16 %v803, %v799
    %v1036 = vpack.c.b16 %v808, %v804
    %v1037 = vpack.c.b16 %v809, %v805
    %v1038 = vpack.c.b16 %v810, %v806
    %v1039 = vpack.c.b16 %v811, %v807
    %v1040 = vpack.c.b16 %v816, %v812
    %v1041 = vpack.c.b16 %v817, %v813
    %v1042 = vpack.c.b16 %v818, %v814
    %v1043 = vpack.c.b16 %v819, %v815
    %v1044 = vpack.c.b16 %v824, %v820
    %v1045 = vpack.c.b16 %v825, %v821
    %v1046 = vpack.c.b16 %v826, %v822
    %v1047 = vpack.c.b16 %v827, %v823
    %v1048 = vpack.c.b16 %v832, %v828
    %v1049 = vpack.c.b16 %v833, %v829
    %v1050 = vpack.c.b16 %v834, %v830
    %v1051 = vpack.c.b16 %v835, %v831
    %v1052 = vpack.c.b16 %v840, %v836
    %v1053 = vpack.c.b16 %v841, %v837
    %v1054 = vpack.c.b16 %v842, %v838
    %v1055 = vpack.c.b16 %v843, %v839
    %v1056 = vpack.c.b16 %v848, %v844
    %v1057 = vpack.c.b16 %v849, %v845
    %v1058 = vpack.c.b16 %v850, %v846
    %v1059 = vpack.c.b16 %v851, %v847
    %v1060 = vpack.c.b16 %v856, %v852
    %v1061 = vpack.c.b16 %v857, %v853
    %v1062 = vpack.c.b16 %v858, %v854
    %v1063 = vpack.c.b16 %v859, %v855
    %v1064 = vpack.c.b16 %v864, %v860
    %v1065 = vpack.c.b16 %v865, %v861
    %v1066 = vpack.c.b16 %v866, %v862
    %v1067 = vpack.c.b16 %v867, %v863
    %v1068 = vpack.c.b16 %v872, %v868
    %v1069 = vpack.c.b16 %v873, %v869
    %v1070 = vpack.c.b16 %v874, %v870
    %v1071 = vpack.c.b16 %v875, %v871
    %vm1268 = vcmask 130048
    %v1270 = vsel %vm1268, %v81, 0
    %1272 = vmatpush.bf16.msra.mxu0 %v904
    %1273 = vmatpush.bf16.msra.mxu0 %v900
    %1274 = vmatpush.bf16.msra.mxu0 %v896
    %1275 = vmatpush.bf16.msra.mxu0 %v892
    %1276 = vmatpush.bf16.msra.mxu0 %v888
    %1277 = vmatpush.bf16.msra.mxu0 %v884
    %1278 = vmatpush.bf16.msra.mxu0 %v880
    %1279 = vmatpush.bf16.msra.mxu0 %v876
    %1280 = vmatmul.bf16.gmra.mxu0 %v75
    %v1281 = vpop.f32.mrf.mxu0
    %v1282 = vadd.f32 %v280, %v1281
    %v1283 = vpop.f32.mrf.mxu0
    %v1284 = vadd.f32 %v280, %v1283
    %1285 = vdwg.mxu0
    %1286 = vmatpush.bf16.msra.mxu0 %v936
    %1287 = vmatpush.bf16.msra.mxu0 %v932
    %1288 = vmatpush.bf16.msra.mxu0 %v928
    %1289 = vmatpush.bf16.msra.mxu0 %v924
    %1290 = vmatpush.bf16.msra.mxu0 %v920
    %1291 = vmatpush.bf16.msra.mxu0 %v916
    %1292 = vmatpush.bf16.msra.mxu0 %v912
    %1293 = vmatpush.bf16.msra.mxu0 %v908
    %1294 = vmatmul.bf16.gmra.mxu0 %v76
    %v1295 = vpop.f32.mrf.mxu0
    %v1296 = vadd.f32 %v1282, %v1295
    %v1297 = vpop.f32.mrf.mxu0
    %v1298 = vadd.f32 %v1284, %v1297
    %1299 = vdwg.mxu0
    %1300 = vmatpush.bf16.msra.mxu0 %v968
    %1301 = vmatpush.bf16.msra.mxu0 %v964
    %1302 = vmatpush.bf16.msra.mxu0 %v960
    %1303 = vmatpush.bf16.msra.mxu0 %v956
    %1304 = vmatpush.bf16.msra.mxu0 %v952
    %1305 = vmatpush.bf16.msra.mxu0 %v948
    %1306 = vmatpush.bf16.msra.mxu0 %v944
    %1307 = vmatpush.bf16.msra.mxu0 %v940
    %1308 = vmatmul.bf16.gmra.mxu0 %v77
    %v1309 = vpop.f32.mrf.mxu0
    %v1310 = vadd.f32 %v1296, %v1309
    %v1311 = vpop.f32.mrf.mxu0
    %v1312 = vadd.f32 %v1298, %v1311
    %1313 = vdwg.mxu0
    %1314 = vmatpush.bf16.msra.mxu0 %v1000
    %1315 = vmatpush.bf16.msra.mxu0 %v996
    %1316 = vmatpush.bf16.msra.mxu0 %v992
    %1317 = vmatpush.bf16.msra.mxu0 %v988
    %1318 = vmatpush.bf16.msra.mxu0 %v984
    %1319 = vmatpush.bf16.msra.mxu0 %v980
    %1320 = vmatpush.bf16.msra.mxu0 %v976
    %1321 = vmatpush.bf16.msra.mxu0 %v972
    %1322 = vmatmul.bf16.gmra.mxu0 %v78
    %v1323 = vpop.f32.mrf.mxu0
    %v1324 = vadd.f32 %v1310, %v1323
    %v1325 = vpop.f32.mrf.mxu0
    %v1326 = vadd.f32 %v1312, %v1325
    %1327 = vdwg.mxu0
    %1328 = vmatpush.bf16.msra.mxu0 %v1032
    %1329 = vmatpush.bf16.msra.mxu0 %v1028
    %1330 = vmatpush.bf16.msra.mxu0 %v1024
    %1331 = vmatpush.bf16.msra.mxu0 %v1020
    %1332 = vmatpush.bf16.msra.mxu0 %v1016
    %1333 = vmatpush.bf16.msra.mxu0 %v1012
    %1334 = vmatpush.bf16.msra.mxu0 %v1008
    %1335 = vmatpush.bf16.msra.mxu0 %v1004
    %1336 = vmatmul.bf16.gmra.mxu0 %v79
    %v1337 = vpop.f32.mrf.mxu0
    %v1338 = vadd.f32 %v1324, %v1337
    %v1339 = vpop.f32.mrf.mxu0
    %v1340 = vadd.f32 %v1326, %v1339
    %1341 = vdwg.mxu0
    %1342 = vmatpush.bf16.msra.mxu0 %v1064
    %1343 = vmatpush.bf16.msra.mxu0 %v1060
    %1344 = vmatpush.bf16.msra.mxu0 %v1056
    %1345 = vmatpush.bf16.msra.mxu0 %v1052
    %1346 = vmatpush.bf16.msra.mxu0 %v1048
    %1347 = vmatpush.bf16.msra.mxu0 %v1044
    %1348 = vmatpush.bf16.msra.mxu0 %v1040
    %1349 = vmatpush.bf16.msra.mxu0 %v1036
    %1350 = vmatmul.bf16.gmra.mxu0 %v80
    %v1351 = vpop.f32.mrf.mxu0
    %v1352 = vadd.f32 %v1338, %v1351
    %v1353 = vpop.f32.mrf.mxu0
    %v1354 = vadd.f32 %v1340, %v1353
    %1355 = vdwg.mxu0
    %1356 = vmatpush.bf16.msra.mxu0 0
    %1357 = vmatpush.bf16.msra.mxu0 0
    %1358 = vmatpush.bf16.msra.mxu0 0
    %1359 = vmatpush.bf16.msra.mxu0 0
    %1360 = vmatpush.bf16.msra.mxu0 0
    %1361 = vmatpush.bf16.msra.mxu0 0
    %1362 = vmatpush.bf16.msra.mxu0 0
    %1363 = vmatpush.bf16.msra.mxu0 %v1068
    %1364 = vmatmul.bf16.gmra.mxu0 %v1270
    %v1365 = vpop.f32.mrf.mxu0
    %v1366 = vadd.f32 %v1352, %v1365
    %v1367 = vpop.f32.mrf.mxu0
    %v1368 = vadd.f32 %v1354, %v1367
    %1369 = vdwg.mxu0
    %1370 = vmatpush.bf16.msra.mxu0 %v905
    %1371 = vmatpush.bf16.msra.mxu0 %v901
    %1372 = vmatpush.bf16.msra.mxu0 %v897
    %1373 = vmatpush.bf16.msra.mxu0 %v893
    %1374 = vmatpush.bf16.msra.mxu0 %v889
    %1375 = vmatpush.bf16.msra.mxu0 %v885
    %1376 = vmatpush.bf16.msra.mxu0 %v881
    %1377 = vmatpush.bf16.msra.mxu0 %v877
    %1378 = vmatmul.bf16.gmra.mxu0 %v75
    %v1379 = vpop.f32.mrf.mxu0
    %v1380 = vadd.f32 %v281, %v1379
    %v1381 = vpop.f32.mrf.mxu0
    %v1382 = vadd.f32 %v281, %v1381
    %1383 = vdwg.mxu0
    %1384 = vmatpush.bf16.msra.mxu0 %v937
    %1385 = vmatpush.bf16.msra.mxu0 %v933
    %1386 = vmatpush.bf16.msra.mxu0 %v929
    %1387 = vmatpush.bf16.msra.mxu0 %v925
    %1388 = vmatpush.bf16.msra.mxu0 %v921
    %1389 = vmatpush.bf16.msra.mxu0 %v917
    %1390 = vmatpush.bf16.msra.mxu0 %v913
    %1391 = vmatpush.bf16.msra.mxu0 %v909
    %1392 = vmatmul.bf16.gmra.mxu0 %v76
    %v1393 = vpop.f32.mrf.mxu0
    %v1394 = vadd.f32 %v1380, %v1393
    %v1395 = vpop.f32.mrf.mxu0
    %v1396 = vadd.f32 %v1382, %v1395
    %1397 = vdwg.mxu0
    %1398 = vmatpush.bf16.msra.mxu0 %v969
    %1399 = vmatpush.bf16.msra.mxu0 %v965
    %1400 = vmatpush.bf16.msra.mxu0 %v961
    %1401 = vmatpush.bf16.msra.mxu0 %v957
    %1402 = vmatpush.bf16.msra.mxu0 %v953
    %1403 = vmatpush.bf16.msra.mxu0 %v949
    %1404 = vmatpush.bf16.msra.mxu0 %v945
    %1405 = vmatpush.bf16.msra.mxu0 %v941
    %1406 = vmatmul.bf16.gmra.mxu0 %v77
    %v1407 = vpop.f32.mrf.mxu0
    %v1408 = vadd.f32 %v1394, %v1407
    %v1409 = vpop.f32.mrf.mxu0
    %v1410 = vadd.f32 %v1396, %v1409
    %1411 = vdwg.mxu0
    %1412 = vmatpush.bf16.msra.mxu0 %v1001
    %1413 = vmatpush.bf16.msra.mxu0 %v997
    %1414 = vmatpush.bf16.msra.mxu0 %v993
    %1415 = vmatpush.bf16.msra.mxu0 %v989
    %1416 = vmatpush.bf16.msra.mxu0 %v985
    %1417 = vmatpush.bf16.msra.mxu0 %v981
    %1418 = vmatpush.bf16.msra.mxu0 %v977
    %1419 = vmatpush.bf16.msra.mxu0 %v973
    %1420 = vmatmul.bf16.gmra.mxu0 %v78
    %v1421 = vpop.f32.mrf.mxu0
    %v1422 = vadd.f32 %v1408, %v1421
    %v1423 = vpop.f32.mrf.mxu0
    %v1424 = vadd.f32 %v1410, %v1423
    %1425 = vdwg.mxu0
    %1426 = vmatpush.bf16.msra.mxu0 %v1033
    %1427 = vmatpush.bf16.msra.mxu0 %v1029
    %1428 = vmatpush.bf16.msra.mxu0 %v1025
    %1429 = vmatpush.bf16.msra.mxu0 %v1021
    %1430 = vmatpush.bf16.msra.mxu0 %v1017
    %1431 = vmatpush.bf16.msra.mxu0 %v1013
    %1432 = vmatpush.bf16.msra.mxu0 %v1009
    %1433 = vmatpush.bf16.msra.mxu0 %v1005
    %1434 = vmatmul.bf16.gmra.mxu0 %v79
    %v1435 = vpop.f32.mrf.mxu0
    %v1436 = vadd.f32 %v1422, %v1435
    %v1437 = vpop.f32.mrf.mxu0
    %v1438 = vadd.f32 %v1424, %v1437
    %1439 = vdwg.mxu0
    %1440 = vmatpush.bf16.msra.mxu0 %v1065
    %1441 = vmatpush.bf16.msra.mxu0 %v1061
    %1442 = vmatpush.bf16.msra.mxu0 %v1057
    %1443 = vmatpush.bf16.msra.mxu0 %v1053
    %1444 = vmatpush.bf16.msra.mxu0 %v1049
    %1445 = vmatpush.bf16.msra.mxu0 %v1045
    %1446 = vmatpush.bf16.msra.mxu0 %v1041
    %1447 = vmatpush.bf16.msra.mxu0 %v1037
    %1448 = vmatmul.bf16.gmra.mxu0 %v80
    %v1449 = vpop.f32.mrf.mxu0
    %v1450 = vadd.f32 %v1436, %v1449
    %v1451 = vpop.f32.mrf.mxu0
    %v1452 = vadd.f32 %v1438, %v1451
    %1453 = vdwg.mxu0
    %1454 = vmatpush.bf16.msra.mxu0 0
    %1455 = vmatpush.bf16.msra.mxu0 0
    %1456 = vmatpush.bf16.msra.mxu0 0
    %1457 = vmatpush.bf16.msra.mxu0 0
    %1458 = vmatpush.bf16.msra.mxu0 0
    %1459 = vmatpush.bf16.msra.mxu0 0
    %1460 = vmatpush.bf16.msra.mxu0 0
    %1461 = vmatpush.bf16.msra.mxu0 %v1069
    %1462 = vmatmul.bf16.gmra.mxu0 %v1270
    %v1463 = vpop.f32.mrf.mxu0
    %v1464 = vadd.f32 %v1450, %v1463
    %v1465 = vpop.f32.mrf.mxu0
    %v1466 = vadd.f32 %v1452, %v1465
    %1467 = vdwg.mxu0
    %1468 = vmatpush.bf16.msra.mxu0 %v906
    %1469 = vmatpush.bf16.msra.mxu0 %v902
    %1470 = vmatpush.bf16.msra.mxu0 %v898
    %1471 = vmatpush.bf16.msra.mxu0 %v894
    %1472 = vmatpush.bf16.msra.mxu0 %v890
    %1473 = vmatpush.bf16.msra.mxu0 %v886
    %1474 = vmatpush.bf16.msra.mxu0 %v882
    %1475 = vmatpush.bf16.msra.mxu0 %v878
    %1476 = vmatmul.bf16.gmra.mxu0 %v75
    %v1477 = vpop.f32.mrf.mxu0
    %v1478 = vadd.f32 %v282, %v1477
    %v1479 = vpop.f32.mrf.mxu0
    %v1480 = vadd.f32 %v282, %v1479
    %1481 = vdwg.mxu0
    %1482 = vmatpush.bf16.msra.mxu0 %v938
    %1483 = vmatpush.bf16.msra.mxu0 %v934
    %1484 = vmatpush.bf16.msra.mxu0 %v930
    %1485 = vmatpush.bf16.msra.mxu0 %v926
    %1486 = vmatpush.bf16.msra.mxu0 %v922
    %1487 = vmatpush.bf16.msra.mxu0 %v918
    %1488 = vmatpush.bf16.msra.mxu0 %v914
    %1489 = vmatpush.bf16.msra.mxu0 %v910
    %1490 = vmatmul.bf16.gmra.mxu0 %v76
    %v1491 = vpop.f32.mrf.mxu0
    %v1492 = vadd.f32 %v1478, %v1491
    %v1493 = vpop.f32.mrf.mxu0
    %v1494 = vadd.f32 %v1480, %v1493
    %1495 = vdwg.mxu0
    %1496 = vmatpush.bf16.msra.mxu0 %v970
    %1497 = vmatpush.bf16.msra.mxu0 %v966
    %1498 = vmatpush.bf16.msra.mxu0 %v962
    %1499 = vmatpush.bf16.msra.mxu0 %v958
    %1500 = vmatpush.bf16.msra.mxu0 %v954
    %1501 = vmatpush.bf16.msra.mxu0 %v950
    %1502 = vmatpush.bf16.msra.mxu0 %v946
    %1503 = vmatpush.bf16.msra.mxu0 %v942
    %1504 = vmatmul.bf16.gmra.mxu0 %v77
    %v1505 = vpop.f32.mrf.mxu0
    %v1506 = vadd.f32 %v1492, %v1505
    %v1507 = vpop.f32.mrf.mxu0
    %v1508 = vadd.f32 %v1494, %v1507
    %1509 = vdwg.mxu0
    %1510 = vmatpush.bf16.msra.mxu0 %v1002
    %1511 = vmatpush.bf16.msra.mxu0 %v998
    %1512 = vmatpush.bf16.msra.mxu0 %v994
    %1513 = vmatpush.bf16.msra.mxu0 %v990
    %1514 = vmatpush.bf16.msra.mxu0 %v986
    %1515 = vmatpush.bf16.msra.mxu0 %v982
    %1516 = vmatpush.bf16.msra.mxu0 %v978
    %1517 = vmatpush.bf16.msra.mxu0 %v974
    %1518 = vmatmul.bf16.gmra.mxu0 %v78
    %v1519 = vpop.f32.mrf.mxu0
    %v1520 = vadd.f32 %v1506, %v1519
    %v1521 = vpop.f32.mrf.mxu0
    %v1522 = vadd.f32 %v1508, %v1521
    %1523 = vdwg.mxu0
    %1524 = vmatpush.bf16.msra.mxu0 %v1034
    %1525 = vmatpush.bf16.msra.mxu0 %v1030
    %1526 = vmatpush.bf16.msra.mxu0 %v1026
    %1527 = vmatpush.bf16.msra.mxu0 %v1022
    %1528 = vmatpush.bf16.msra.mxu0 %v1018
    %1529 = vmatpush.bf16.msra.mxu0 %v1014
    %1530 = vmatpush.bf16.msra.mxu0 %v1010
    %1531 = vmatpush.bf16.msra.mxu0 %v1006
    %1532 = vmatmul.bf16.gmra.mxu0 %v79
    %v1533 = vpop.f32.mrf.mxu0
    %v1534 = vadd.f32 %v1520, %v1533
    %v1535 = vpop.f32.mrf.mxu0
    %v1536 = vadd.f32 %v1522, %v1535
    %1537 = vdwg.mxu0
    %1538 = vmatpush.bf16.msra.mxu0 %v1066
    %1539 = vmatpush.bf16.msra.mxu0 %v1062
    %1540 = vmatpush.bf16.msra.mxu0 %v1058
    %1541 = vmatpush.bf16.msra.mxu0 %v1054
    %1542 = vmatpush.bf16.msra.mxu0 %v1050
    %1543 = vmatpush.bf16.msra.mxu0 %v1046
    %1544 = vmatpush.bf16.msra.mxu0 %v1042
    %1545 = vmatpush.bf16.msra.mxu0 %v1038
    %1546 = vmatmul.bf16.gmra.mxu0 %v80
    %v1547 = vpop.f32.mrf.mxu0
    %v1548 = vadd.f32 %v1534, %v1547
    %v1549 = vpop.f32.mrf.mxu0
    %v1550 = vadd.f32 %v1536, %v1549
    %1551 = vdwg.mxu0
    %1552 = vmatpush.bf16.msra.mxu0 0
    %1553 = vmatpush.bf16.msra.mxu0 0
    %1554 = vmatpush.bf16.msra.mxu0 0
    %1555 = vmatpush.bf16.msra.mxu0 0
    %1556 = vmatpush.bf16.msra.mxu0 0
    %1557 = vmatpush.bf16.msra.mxu0 0
    %1558 = vmatpush.bf16.msra.mxu0 0
    %1559 = vmatpush.bf16.msra.mxu0 %v1070
    %1560 = vmatmul.bf16.gmra.mxu0 %v1270
    %v1561 = vpop.f32.mrf.mxu0
    %v1562 = vadd.f32 %v1548, %v1561
    %v1563 = vpop.f32.mrf.mxu0
    %v1564 = vadd.f32 %v1550, %v1563
    %1565 = vdwg.mxu0
    %1566 = vmatpush.bf16.msra.mxu0 %v907
    %1567 = vmatpush.bf16.msra.mxu0 %v903
    %1568 = vmatpush.bf16.msra.mxu0 %v899
    %1569 = vmatpush.bf16.msra.mxu0 %v895
    %1570 = vmatpush.bf16.msra.mxu0 %v891
    %1571 = vmatpush.bf16.msra.mxu0 %v887
    %1572 = vmatpush.bf16.msra.mxu0 %v883
    %1573 = vmatpush.bf16.msra.mxu0 %v879
    %1574 = vmatmul.bf16.gmra.mxu0 %v75
    %v1575 = vpop.f32.mrf.mxu0
    %v1576 = vadd.f32 %v283, %v1575
    %v1577 = vpop.f32.mrf.mxu0
    %v1578 = vadd.f32 %v283, %v1577
    %1579 = vdwg.mxu0
    %1580 = vmatpush.bf16.msra.mxu0 %v939
    %1581 = vmatpush.bf16.msra.mxu0 %v935
    %1582 = vmatpush.bf16.msra.mxu0 %v931
    %1583 = vmatpush.bf16.msra.mxu0 %v927
    %1584 = vmatpush.bf16.msra.mxu0 %v923
    %1585 = vmatpush.bf16.msra.mxu0 %v919
    %1586 = vmatpush.bf16.msra.mxu0 %v915
    %1587 = vmatpush.bf16.msra.mxu0 %v911
    %1588 = vmatmul.bf16.gmra.mxu0 %v76
    %v1589 = vpop.f32.mrf.mxu0
    %v1590 = vadd.f32 %v1576, %v1589
    %v1591 = vpop.f32.mrf.mxu0
    %v1592 = vadd.f32 %v1578, %v1591
    %1593 = vdwg.mxu0
    %1594 = vmatpush.bf16.msra.mxu0 %v971
    %1595 = vmatpush.bf16.msra.mxu0 %v967
    %1596 = vmatpush.bf16.msra.mxu0 %v963
    %1597 = vmatpush.bf16.msra.mxu0 %v959
    %1598 = vmatpush.bf16.msra.mxu0 %v955
    %1599 = vmatpush.bf16.msra.mxu0 %v951
    %1600 = vmatpush.bf16.msra.mxu0 %v947
    %1601 = vmatpush.bf16.msra.mxu0 %v943
    %1602 = vmatmul.bf16.gmra.mxu0 %v77
    %v1603 = vpop.f32.mrf.mxu0
    %v1604 = vadd.f32 %v1590, %v1603
    %v1605 = vpop.f32.mrf.mxu0
    %v1606 = vadd.f32 %v1592, %v1605
    %1607 = vdwg.mxu0
    %1608 = vmatpush.bf16.msra.mxu0 %v1003
    %1609 = vmatpush.bf16.msra.mxu0 %v999
    %1610 = vmatpush.bf16.msra.mxu0 %v995
    %1611 = vmatpush.bf16.msra.mxu0 %v991
    %1612 = vmatpush.bf16.msra.mxu0 %v987
    %1613 = vmatpush.bf16.msra.mxu0 %v983
    %1614 = vmatpush.bf16.msra.mxu0 %v979
    %1615 = vmatpush.bf16.msra.mxu0 %v975
    %1616 = vmatmul.bf16.gmra.mxu0 %v78
    %v1617 = vpop.f32.mrf.mxu0
    %v1618 = vadd.f32 %v1604, %v1617
    %v1619 = vpop.f32.mrf.mxu0
    %v1620 = vadd.f32 %v1606, %v1619
    %1621 = vdwg.mxu0
    %1622 = vmatpush.bf16.msra.mxu0 %v1035
    %1623 = vmatpush.bf16.msra.mxu0 %v1031
    %1624 = vmatpush.bf16.msra.mxu0 %v1027
    %1625 = vmatpush.bf16.msra.mxu0 %v1023
    %1626 = vmatpush.bf16.msra.mxu0 %v1019
    %1627 = vmatpush.bf16.msra.mxu0 %v1015
    %1628 = vmatpush.bf16.msra.mxu0 %v1011
    %1629 = vmatpush.bf16.msra.mxu0 %v1007
    %1630 = vmatmul.bf16.gmra.mxu0 %v79
    %v1631 = vpop.f32.mrf.mxu0
    %v1632 = vadd.f32 %v1618, %v1631
    %v1633 = vpop.f32.mrf.mxu0
    %v1634 = vadd.f32 %v1620, %v1633
    %1635 = vdwg.mxu0
    %1636 = vmatpush.bf16.msra.mxu0 %v1067
    %1637 = vmatpush.bf16.msra.mxu0 %v1063
    %1638 = vmatpush.bf16.msra.mxu0 %v1059
    %1639 = vmatpush.bf16.msra.mxu0 %v1055
    %1640 = vmatpush.bf16.msra.mxu0 %v1051
    %1641 = vmatpush.bf16.msra.mxu0 %v1047
    %1642 = vmatpush.bf16.msra.mxu0 %v1043
    %1643 = vmatpush.bf16.msra.mxu0 %v1039
    %1644 = vmatmul.bf16.gmra.mxu0 %v80
    %v1645 = vpop.f32.mrf.mxu0
    %v1646 = vadd.f32 %v1632, %v1645
    %v1647 = vpop.f32.mrf.mxu0
    %v1648 = vadd.f32 %v1634, %v1647
    %1649 = vdwg.mxu0
    %1650 = vmatpush.bf16.msra.mxu0 0
    %1651 = vmatpush.bf16.msra.mxu0 0
    %1652 = vmatpush.bf16.msra.mxu0 0
    %1653 = vmatpush.bf16.msra.mxu0 0
    %1654 = vmatpush.bf16.msra.mxu0 0
    %1655 = vmatpush.bf16.msra.mxu0 0
    %1656 = vmatpush.bf16.msra.mxu0 0
    %1657 = vmatpush.bf16.msra.mxu0 %v1071
    %1658 = vmatmul.bf16.gmra.mxu0 %v1270
    %v1659 = vpop.f32.mrf.mxu0
    %v1660 = vadd.f32 %v1646, %v1659
    %v1661 = vpop.f32.mrf.mxu0
    %v1662 = vadd.f32 %v1648, %v1661
    %1663 = vdwg.mxu0
    %v1664 = vmax.f32 %v1366, 0.0
    %v1665 = vmax.f32 %v1464, 0.0
    %v1666 = vmax.f32 %v1562, 0.0
    %v1667 = vmax.f32 %v1660, 0.0
    %v1668 = vmax.f32 %v1368, 0.0
    %v1669 = vmax.f32 %v1466, 0.0
    %v1670 = vmax.f32 %v1564, 0.0
    %v1671 = vmax.f32 %v1662, 0.0
    %v1672 = vpack.c.bf16 %v1668, %v1664
    %v1673 = vpack.c.bf16 %v1669, %v1665
    %v1674 = vpack.c.bf16 %v1670, %v1666
    %v1675 = vpack.c.bf16 %v1671, %v1667
    %v1676 = vld [vmem:[#allocation5] sm:$0xff]
    %v1677 = vld [vmem:[#allocation5 + $0x8] sm:$0xff]
    %v1678 = vld [vmem:[#allocation5 + $0x10] sm:$0xff]
    %v1679 = vld [vmem:[#allocation5 + $0x18] sm:$0xff]
    %v1680 = vld [vmem:[#allocation5 + $0x20] sm:$0xff]
    %v1681 = vld [vmem:[#allocation5 + $0x28] sm:$0xff]
    %v1682 = vld [vmem:[#allocation5 + $0x30] sm:$0xff]
    %v1683 = vld [vmem:[#allocation5 + $0x38] sm:$0xff]
    %v1684 = vld [vmem:[#allocation5 + $0x40] sm:$0xff]
    %v1685 = vld [vmem:[#allocation5 + $0x48] sm:$0xff]
    %v1686 = vld [vmem:[#allocation5 + $0x50] sm:$0xff]
    %v1687 = vld [vmem:[#allocation5 + $0x58] sm:$0xff]
    %v1688 = vld [vmem:[#allocation5 + $0x60] sm:$0xff]
    %v1689 = vld [vmem:[#allocation5 + $0x68] sm:$0xff]
    %v1690 = vld [vmem:[#allocation5 + $0x70] sm:$0xff]
    %v1691 = vld [vmem:[#allocation5 + $0x78] sm:$0xff]
    %v1692 = vld [vmem:[#allocation5 + $0x80] sm:$0xff]
    %v1693 = vld [vmem:[#allocation5 + $0x88] sm:$0xff]
    %v1694 = vld [vmem:[#allocation5 + $0x90] sm:$0xff]
    %v1695 = vld [vmem:[#allocation5 + $0x98] sm:$0xff]
    %v1696 = vld [vmem:[#allocation5 + $0xa0] sm:$0xff]
    %v1697 = vld [vmem:[#allocation5 + $0xa8] sm:$0xff]
    %v1698 = vld [vmem:[#allocation5 + $0xb0] sm:$0xff]
    %v1699 = vld [vmem:[#allocation5 + $0xb8] sm:$0xff]
    %v1700 = vld [vmem:[#allocation5 + $0xc0] sm:$0xff]
    %v1701 = vld [vmem:[#allocation5 + $0xc8] sm:$0xff]
    %v1702 = vld [vmem:[#allocation5 + $0xd0] sm:$0xff]
    %v1703 = vld [vmem:[#allocation5 + $0xd8] sm:$0xff]
    %v1704 = vld [vmem:[#allocation5 + $0xe0] sm:$0xff]
    %v1705 = vld [vmem:[#allocation5 + $0xe8] sm:$0xff]
    %v1706 = vld [vmem:[#allocation5 + $0xf0] sm:$0xff]
    %v1707 = vld [vmem:[#allocation5 + $0xf8] sm:$0xff]
    %v1708 = vld [vmem:[#allocation5 + $0x100] sm:$0xff]
    %v1709 = vld [vmem:[#allocation5 + $0x108] sm:$0xff]
    %v1710 = vld [vmem:[#allocation5 + $0x110] sm:$0xff]
    %v1711 = vld [vmem:[#allocation5 + $0x118] sm:$0xff]
    %v1712 = vld [vmem:[#allocation5 + $0x120] sm:$0xff]
    %v1713 = vld [vmem:[#allocation5 + $0x128] sm:$0xff]
    %v1714 = vld [vmem:[#allocation5 + $0x130] sm:$0xff]
    %v1715 = vld [vmem:[#allocation5 + $0x138] sm:$0xff]
    %v1716 = vld [vmem:[#allocation5 + $0x140] sm:$0xff]
    %v1717 = vld [vmem:[#allocation5 + $0x148] sm:$0xff]
    %v1718 = vld [vmem:[#allocation5 + $0x150] sm:$0xff]
    %v1719 = vld [vmem:[#allocation5 + $0x158] sm:$0xff]
    %v1720 = vld [vmem:[#allocation5 + $0x160] sm:$0xff]
    %v1721 = vld [vmem:[#allocation5 + $0x168] sm:$0xff]
    %v1722 = vld [vmem:[#allocation5 + $0x170] sm:$0xff]
    %v1723 = vld [vmem:[#allocation5 + $0x178] sm:$0xff]
    %v1724 = vld [vmem:[#allocation5 + $0x180] sm:$0xff]
    %v1725 = vld [vmem:[#allocation5 + $0x188] sm:$0xff]
    %v1726 = vld [vmem:[#allocation5 + $0x190] sm:$0xff]
    %v1727 = vld [vmem:[#allocation5 + $0x198] sm:$0xff]
    %v1728 = vld [vmem:[#allocation5 + $0x1a0] sm:$0xff]
    %v1729 = vld [vmem:[#allocation5 + $0x1a8] sm:$0xff]
    %v1730 = vld [vmem:[#allocation5 + $0x1b0] sm:$0xff]
    %v1731 = vld [vmem:[#allocation5 + $0x1b8] sm:$0xff]
    %v1732 = vld [vmem:[#allocation5 + $0x1c0] sm:$0xff]
    %v1733 = vld [vmem:[#allocation5 + $0x1c8] sm:$0xff]
    %v1734 = vld [vmem:[#allocation5 + $0x1d0] sm:$0xff]
    %v1735 = vld [vmem:[#allocation5 + $0x1d8] sm:$0xff]
    %v1736 = vld [vmem:[#allocation5 + $0x1e0] sm:$0xff]
    %v1737 = vld [vmem:[#allocation5 + $0x1e8] sm:$0xff]
    %v1738 = vld [vmem:[#allocation5 + $0x1f0] sm:$0xff]
    %v1739 = vld [vmem:[#allocation5 + $0x1f8] sm:$0xff]
    %v1740 = vld [vmem:[%s4] sm:$0x3]
    %v1742 = vperm.slane %v1740, 0
    %v1743 = vperm.slane %v1740, 1
    %v1810 = vunpack.c.l.b16 %v1676
    %v1811 = vunpack.c.h.b16 %v1676
    %v1812 = vunpack.c.l.b16 %v1677
    %v1813 = vunpack.c.h.b16 %v1677
    %v1814 = vunpack.c.l.b16 %v1678
    %v1815 = vunpack.c.h.b16 %v1678
    %v1816 = vunpack.c.l.b16 %v1679
    %v1817 = vunpack.c.h.b16 %v1679
    %v1818 = vunpack.c.l.b16 %v1680
    %v1819 = vunpack.c.h.b16 %v1680
    %v1820 = vunpack.c.l.b16 %v1681
    %v1821 = vunpack.c.h.b16 %v1681
    %v1822 = vunpack.c.l.b16 %v1682
    %v1823 = vunpack.c.h.b16 %v1682
    %v1824 = vunpack.c.l.b16 %v1683
    %v1825 = vunpack.c.h.b16 %v1683
    %v1826 = vunpack.c.l.b16 %v1684
    %v1827 = vunpack.c.h.b16 %v1684
    %v1828 = vunpack.c.l.b16 %v1685
    %v1829 = vunpack.c.h.b16 %v1685
    %v1830 = vunpack.c.l.b16 %v1686
    %v1831 = vunpack.c.h.b16 %v1686
    %v1832 = vunpack.c.l.b16 %v1687
    %v1833 = vunpack.c.h.b16 %v1687
    %v1834 = vunpack.c.l.b16 %v1688
    %v1835 = vunpack.c.h.b16 %v1688
    %v1836 = vunpack.c.l.b16 %v1689
    %v1837 = vunpack.c.h.b16 %v1689
    %v1838 = vunpack.c.l.b16 %v1690
    %v1839 = vunpack.c.h.b16 %v1690
    %v1840 = vunpack.c.l.b16 %v1691
    %v1841 = vunpack.c.h.b16 %v1691
    %v1842 = vunpack.c.l.b16 %v1692
    %v1843 = vunpack.c.h.b16 %v1692
    %v1844 = vunpack.c.l.b16 %v1693
    %v1845 = vunpack.c.h.b16 %v1693
    %v1846 = vunpack.c.l.b16 %v1694
    %v1847 = vunpack.c.h.b16 %v1694
    %v1848 = vunpack.c.l.b16 %v1695
    %v1849 = vunpack.c.h.b16 %v1695
    %v1850 = vunpack.c.l.b16 %v1696
    %v1851 = vunpack.c.h.b16 %v1696
    %v1852 = vunpack.c.l.b16 %v1697
    %v1853 = vunpack.c.h.b16 %v1697
    %v1854 = vunpack.c.l.b16 %v1698
    %v1855 = vunpack.c.h.b16 %v1698
    %v1856 = vunpack.c.l.b16 %v1699
    %v1857 = vunpack.c.h.b16 %v1699
    %v1858 = vunpack.c.l.b16 %v1700
    %v1859 = vunpack.c.h.b16 %v1700
    %v1860 = vunpack.c.l.b16 %v1701
    %v1861 = vunpack.c.h.b16 %v1701
    %v1862 = vunpack.c.l.b16 %v1702
    %v1863 = vunpack.c.h.b16 %v1702
    %v1864 = vunpack.c.l.b16 %v1703
    %v1865 = vunpack.c.h.b16 %v1703
    %v1866 = vunpack.c.l.b16 %v1704
    %v1867 = vunpack.c.h.b16 %v1704
    %v1868 = vunpack.c.l.b16 %v1705
    %v1869 = vunpack.c.h.b16 %v1705
    %v1870 = vunpack.c.l.b16 %v1706
    %v1871 = vunpack.c.h.b16 %v1706
    %v1872 = vunpack.c.l.b16 %v1707
    %v1873 = vunpack.c.h.b16 %v1707
    %v1874 = vunpack.c.l.b16 %v1708
    %v1875 = vunpack.c.h.b16 %v1708
    %v1876 = vunpack.c.l.b16 %v1709
    %v1877 = vunpack.c.h.b16 %v1709
    %v1878 = vunpack.c.l.b16 %v1710
    %v1879 = vunpack.c.h.b16 %v1710
    %v1880 = vunpack.c.l.b16 %v1711
    %v1881 = vunpack.c.h.b16 %v1711
    %v1882 = vunpack.c.l.b16 %v1712
    %v1883 = vunpack.c.h.b16 %v1712
    %v1884 = vunpack.c.l.b16 %v1713
    %v1885 = vunpack.c.h.b16 %v1713
    %v1886 = vunpack.c.l.b16 %v1714
    %v1887 = vunpack.c.h.b16 %v1714
    %v1888 = vunpack.c.l.b16 %v1715
    %v1889 = vunpack.c.h.b16 %v1715
    %v1890 = vunpack.c.l.b16 %v1716
    %v1891 = vunpack.c.h.b16 %v1716
    %v1892 = vunpack.c.l.b16 %v1717
    %v1893 = vunpack.c.h.b16 %v1717
    %v1894 = vunpack.c.l.b16 %v1718
    %v1895 = vunpack.c.h.b16 %v1718
    %v1896 = vunpack.c.l.b16 %v1719
    %v1897 = vunpack.c.h.b16 %v1719
    %v1898 = vunpack.c.l.b16 %v1720
    %v1899 = vunpack.c.h.b16 %v1720
    %v1900 = vunpack.c.l.b16 %v1721
    %v1901 = vunpack.c.h.b16 %v1721
    %v1902 = vunpack.c.l.b16 %v1722
    %v1903 = vunpack.c.h.b16 %v1722
    %v1904 = vunpack.c.l.b16 %v1723
    %v1905 = vunpack.c.h.b16 %v1723
    %v1906 = vunpack.c.l.b16 %v1724
    %v1907 = vunpack.c.h.b16 %v1724
    %v1908 = vunpack.c.l.b16 %v1725
    %v1909 = vunpack.c.h.b16 %v1725
    %v1910 = vunpack.c.l.b16 %v1726
    %v1911 = vunpack.c.h.b16 %v1726
    %v1912 = vunpack.c.l.b16 %v1727
    %v1913 = vunpack.c.h.b16 %v1727
    %v1914 = vunpack.c.l.b16 %v1728
    %v1915 = vunpack.c.h.b16 %v1728
    %v1916 = vunpack.c.l.b16 %v1729
    %v1917 = vunpack.c.h.b16 %v1729
    %v1918 = vunpack.c.l.b16 %v1730
    %v1919 = vunpack.c.h.b16 %v1730
    %v1920 = vunpack.c.l.b16 %v1731
    %v1921 = vunpack.c.h.b16 %v1731
    %v1922 = vunpack.c.l.b16 %v1732
    %v1923 = vunpack.c.h.b16 %v1732
    %v1924 = vunpack.c.l.b16 %v1733
    %v1925 = vunpack.c.h.b16 %v1733
    %v1926 = vunpack.c.l.b16 %v1734
    %v1927 = vunpack.c.h.b16 %v1734
    %v1928 = vunpack.c.l.b16 %v1735
    %v1929 = vunpack.c.h.b16 %v1735
    %v1930 = vunpack.c.l.b16 %v1736
    %v1931 = vunpack.c.h.b16 %v1736
    %v1932 = vunpack.c.l.b16 %v1737
    %v1933 = vunpack.c.h.b16 %v1737
    %v1934 = vunpack.c.l.b16 %v1738
    %v1935 = vunpack.c.h.b16 %v1738
    %v1936 = vunpack.c.l.b16 %v1739
    %v1937 = vunpack.c.h.b16 %v1739
    %v1938 = vpack.c.b16 %v1812, %v1810
    %v1939 = vpack.c.b16 %v1813, %v1811
    %v1940 = vpack.c.b16 %v1816, %v1814
    %v1941 = vpack.c.b16 %v1817, %v1815
    %v1942 = vpack.c.b16 %v1820, %v1818
    %v1943 = vpack.c.b16 %v1821, %v1819
    %v1944 = vpack.c.b16 %v1824, %v1822
    %v1945 = vpack.c.b16 %v1825, %v1823
    %v1946 = vpack.c.b16 %v1828, %v1826
    %v1947 = vpack.c.b16 %v1829, %v1827
    %v1948 = vpack.c.b16 %v1832, %v1830
    %v1949 = vpack.c.b16 %v1833, %v1831
    %v1950 = vpack.c.b16 %v1836, %v1834
    %v1951 = vpack.c.b16 %v1837, %v1835
    %v1952 = vpack.c.b16 %v1840, %v1838
    %v1953 = vpack.c.b16 %v1841, %v1839
    %v1954 = vpack.c.b16 %v1844, %v1842
    %v1955 = vpack.c.b16 %v1845, %v1843
    %v1956 = vpack.c.b16 %v1848, %v1846
    %v1957 = vpack.c.b16 %v1849, %v1847
    %v1958 = vpack.c.b16 %v1852, %v1850
    %v1959 = vpack.c.b16 %v1853, %v1851
    %v1960 = vpack.c.b16 %v1856, %v1854
    %v1961 = vpack.c.b16 %v1857, %v1855
    %v1962 = vpack.c.b16 %v1860, %v1858
    %v1963 = vpack.c.b16 %v1861, %v1859
    %v1964 = vpack.c.b16 %v1864, %v1862
    %v1965 = vpack.c.b16 %v1865, %v1863
    %v1966 = vpack.c.b16 %v1868, %v1866
    %v1967 = vpack.c.b16 %v1869, %v1867
    %v1968 = vpack.c.b16 %v1872, %v1870
    %v1969 = vpack.c.b16 %v1873, %v1871
    %v1970 = vpack.c.b16 %v1876, %v1874
    %v1971 = vpack.c.b16 %v1877, %v1875
    %v1972 = vpack.c.b16 %v1880, %v1878
    %v1973 = vpack.c.b16 %v1881, %v1879
    %v1974 = vpack.c.b16 %v1884, %v1882
    %v1975 = vpack.c.b16 %v1885, %v1883
    %v1976 = vpack.c.b16 %v1888, %v1886
    %v1977 = vpack.c.b16 %v1889, %v1887
    %v1978 = vpack.c.b16 %v1892, %v1890
    %v1979 = vpack.c.b16 %v1893, %v1891
    %v1980 = vpack.c.b16 %v1896, %v1894
    %v1981 = vpack.c.b16 %v1897, %v1895
    %v1982 = vpack.c.b16 %v1900, %v1898
    %v1983 = vpack.c.b16 %v1901, %v1899
    %v1984 = vpack.c.b16 %v1904, %v1902
    %v1985 = vpack.c.b16 %v1905, %v1903
    %v1986 = vpack.c.b16 %v1908, %v1906
    %v1987 = vpack.c.b16 %v1909, %v1907
    %v1988 = vpack.c.b16 %v1912, %v1910
    %v1989 = vpack.c.b16 %v1913, %v1911
    %v1990 = vpack.c.b16 %v1916, %v1914
    %v1991 = vpack.c.b16 %v1917, %v1915
    %v1992 = vpack.c.b16 %v1920, %v1918
    %v1993 = vpack.c.b16 %v1921, %v1919
    %v1994 = vpack.c.b16 %v1924, %v1922
    %v1995 = vpack.c.b16 %v1925, %v1923
    %v1996 = vpack.c.b16 %v1928, %v1926
    %v1997 = vpack.c.b16 %v1929, %v1927
    %v1998 = vpack.c.b16 %v1932, %v1930
    %v1999 = vpack.c.b16 %v1933, %v1931
    %v2000 = vpack.c.b16 %v1936, %v1934
    %v2001 = vpack.c.b16 %v1937, %v1935
    %2066 = vmatpush.bf16.msra.mxu0 %v1952
    %2067 = vmatpush.bf16.msra.mxu0 %v1950
    %2068 = vmatpush.bf16.msra.mxu0 %v1948
    %2069 = vmatpush.bf16.msra.mxu0 %v1946
    %2070 = vmatpush.bf16.msra.mxu0 %v1944
    %2071 = vmatpush.bf16.msra.mxu0 %v1942
    %2072 = vmatpush.bf16.msra.mxu0 %v1940
    %2073 = vmatpush.bf16.msra.mxu0 %v1938
    %2074 = vmatmul.bf16.gmra.mxu0 %v1672
    %v2075 = vpop.f32.mrf.mxu0
    %v2076 = vadd.f32 %v1742, %v2075
    %v2077 = vpop.f32.mrf.mxu0
    %v2078 = vadd.f32 %v1742, %v2077
    %2079 = vdwg.mxu0
    %2080 = vmatpush.bf16.msra.mxu0 %v1968
    %2081 = vmatpush.bf16.msra.mxu0 %v1966
    %2082 = vmatpush.bf16.msra.mxu0 %v1964
    %2083 = vmatpush.bf16.msra.mxu0 %v1962
    %2084 = vmatpush.bf16.msra.mxu0 %v1960
    %2085 = vmatpush.bf16.msra.mxu0 %v1958
    %2086 = vmatpush.bf16.msra.mxu0 %v1956
    %2087 = vmatpush.bf16.msra.mxu0 %v1954
    %2088 = vmatmul.bf16.gmra.mxu0 %v1673
    %v2089 = vpop.f32.mrf.mxu0
    %v2090 = vadd.f32 %v2076, %v2089
    %v2091 = vpop.f32.mrf.mxu0
    %v2092 = vadd.f32 %v2078, %v2091
    %2093 = vdwg.mxu0
    %2094 = vmatpush.bf16.msra.mxu0 %v1984
    %2095 = vmatpush.bf16.msra.mxu0 %v1982
    %2096 = vmatpush.bf16.msra.mxu0 %v1980
    %2097 = vmatpush.bf16.msra.mxu0 %v1978
    %2098 = vmatpush.bf16.msra.mxu0 %v1976
    %2099 = vmatpush.bf16.msra.mxu0 %v1974
    %2100 = vmatpush.bf16.msra.mxu0 %v1972
    %2101 = vmatpush.bf16.msra.mxu0 %v1970
    %2102 = vmatmul.bf16.gmra.mxu0 %v1674
    %v2103 = vpop.f32.mrf.mxu0
    %v2104 = vadd.f32 %v2090, %v2103
    %v2105 = vpop.f32.mrf.mxu0
    %v2106 = vadd.f32 %v2092, %v2105
    %2107 = vdwg.mxu0
    %2108 = vmatpush.bf16.msra.mxu0 %v2000
    %2109 = vmatpush.bf16.msra.mxu0 %v1998
    %2110 = vmatpush.bf16.msra.mxu0 %v1996
    %2111 = vmatpush.bf16.msra.mxu0 %v1994
    %2112 = vmatpush.bf16.msra.mxu0 %v1992
    %2113 = vmatpush.bf16.msra.mxu0 %v1990
    %2114 = vmatpush.bf16.msra.mxu0 %v1988
    %2115 = vmatpush.bf16.msra.mxu0 %v1986
    %2116 = vmatmul.bf16.gmra.mxu0 %v1675
    %v2117 = vpop.f32.mrf.mxu0
    %v2118 = vadd.f32 %v2104, %v2117
    %v2119 = vpop.f32.mrf.mxu0
    %v2120 = vadd.f32 %v2106, %v2119
    %2121 = vdwg.mxu0
    %2122 = vmatpush.bf16.msra.mxu0 %v1953
    %2123 = vmatpush.bf16.msra.mxu0 %v1951
    %2124 = vmatpush.bf16.msra.mxu0 %v1949
    %2125 = vmatpush.bf16.msra.mxu0 %v1947
    %2126 = vmatpush.bf16.msra.mxu0 %v1945
    %2127 = vmatpush.bf16.msra.mxu0 %v1943
    %2128 = vmatpush.bf16.msra.mxu0 %v1941
    %2129 = vmatpush.bf16.msra.mxu0 %v1939
    %2130 = vmatmul.bf16.gmra.mxu0 %v1672
    %v2131 = vpop.f32.mrf.mxu0
    %v2132 = vadd.f32 %v1743, %v2131
    %v2133 = vpop.f32.mrf.mxu0
    %v2134 = vadd.f32 %v1743, %v2133
    %2135 = vdwg.mxu0
    %2136 = vmatpush.bf16.msra.mxu0 %v1969
    %2137 = vmatpush.bf16.msra.mxu0 %v1967
    %2138 = vmatpush.bf16.msra.mxu0 %v1965
    %2139 = vmatpush.bf16.msra.mxu0 %v1963
    %2140 = vmatpush.bf16.msra.mxu0 %v1961
    %2141 = vmatpush.bf16.msra.mxu0 %v1959
    %2142 = vmatpush.bf16.msra.mxu0 %v1957
    %2143 = vmatpush.bf16.msra.mxu0 %v1955
    %2144 = vmatmul.bf16.gmra.mxu0 %v1673
    %v2145 = vpop.f32.mrf.mxu0
    %v2146 = vadd.f32 %v2132, %v2145
    %v2147 = vpop.f32.mrf.mxu0
    %v2148 = vadd.f32 %v2134, %v2147
    %2149 = vdwg.mxu0
    %2150 = vmatpush.bf16.msra.mxu0 %v1985
    %2151 = vmatpush.bf16.msra.mxu0 %v1983
    %2152 = vmatpush.bf16.msra.mxu0 %v1981
    %2153 = vmatpush.bf16.msra.mxu0 %v1979
    %2154 = vmatpush.bf16.msra.mxu0 %v1977
    %2155 = vmatpush.bf16.msra.mxu0 %v1975
    %2156 = vmatpush.bf16.msra.mxu0 %v1973
    %2157 = vmatpush.bf16.msra.mxu0 %v1971
    %2158 = vmatmul.bf16.gmra.mxu0 %v1674
    %v2159 = vpop.f32.mrf.mxu0
    %v2160 = vadd.f32 %v2146, %v2159
    %v2161 = vpop.f32.mrf.mxu0
    %v2162 = vadd.f32 %v2148, %v2161
    %2163 = vdwg.mxu0
    %2164 = vmatpush.bf16.msra.mxu0 %v2001
    %2165 = vmatpush.bf16.msra.mxu0 %v1999
    %2166 = vmatpush.bf16.msra.mxu0 %v1997
    %2167 = vmatpush.bf16.msra.mxu0 %v1995
    %2168 = vmatpush.bf16.msra.mxu0 %v1993
    %2169 = vmatpush.bf16.msra.mxu0 %v1991
    %2170 = vmatpush.bf16.msra.mxu0 %v1989
    %2171 = vmatpush.bf16.msra.mxu0 %v1987
    %2172 = vmatmul.bf16.gmra.mxu0 %v1675
    %v2173 = vpop.f32.mrf.mxu0
    %v2174 = vadd.f32 %v2160, %v2173
    %v2175 = vpop.f32.mrf.mxu0
    %v2176 = vadd.f32 %v2162, %v2175
    %2177 = vdwg.mxu0
    %v2178 = vmax.f32 %v2118, 0.0
    %v2179 = vmax.f32 %v2174, 0.0
    %v2180 = vmax.f32 %v2120, 0.0
    %v2181 = vmax.f32 %v2176, 0.0
    %v2182 = vld [vmem:[%s5] sm:$0x3]
    %v2184 = vperm.slane %v2182, 0
    %v2185 = vperm.slane %v2182, 1
    %v2188 = vmul.f32 %v2178, %v2184
    %v2189 = vmul.f32 %v2179, %v2185
    %v2190 = vmul.f32 %v2180, %v2184
    %v2191 = vmul.f32 %v2181, %v2185
    %v2192 = vadd.f32 %v2188, %v2189
    %2193 = vadd.xlane.f32.xlu0 %v2192
    %v2194 = vpop.xlane.xlu0 %2193
    %v2195 = vadd.f32 %v2190, %v2191
    %2196 = vadd.xlane.f32.xlu0 %v2195
    %v2197 = vpop.xlane.xlu0 %2196
    %v2198 = vld [vmem:[#allocation2] sm:$0x1]
    %v2200 = vperm.slane %v2198, 0
    %v2202 = vadd.f32 %v2194, %v2200
    %v2203 = vadd.f32 %v2197, %v2200
    %v2204 = vxor.u32 %v2202, 2147483648
    %v2205 = vxor.u32 %v2203, 2147483648
    %v2206 = vmul.f32 %v2204, 1.442695
    %v2207 = vpow.pop %v2206
    %v2208 = vmul.f32 %v2205, 1.442695
    %v2209 = vpow.pop %v2208
    %v2210 = vadd.f32 %v2207, 1.0
    %v2211 = vadd.f32 %v2209, 1.0
    %v2212 = vrcp.pop %v2210
    %v2213 = vmul.f32 %v2210, %v2212
    %v2214 = vsub.f32 1.0, %v2213
    %v2215 = vmul.f32 %v2212, %v2214
    %v2216 = vadd.f32 %v2212, %v2215
    %vm2217 = vweird.f32 %v2210
    %vm2218 = vweird.f32 %v2212
    %vm2219 = vmor %vm2217, %vm2218
    %v2220 = vsel %vm2219, %v2212, %v2216
    %v2221 = vand.u32 2147483647, %v2210
    %vm2222 = vcmp.eq.f32.partialorder %v2221, 8.507059e+37
    %v2223 = vand.u32 %v2210, 2147483648
    %v2224 = vor.u32 1.1754944e-38, %v2223
    %v2225 = vsel %vm2222, %v2224, %v2220
    %v2226 = vmul.f32 1.0, %v2225
    %v2227 = vrcp.pop %v2211
    %v2228 = vmul.f32 %v2211, %v2227
    %v2229 = vsub.f32 1.0, %v2228
    %v2230 = vmul.f32 %v2227, %v2229
    %v2231 = vadd.f32 %v2227, %v2230
    %vm2232 = vweird.f32 %v2211
    %vm2233 = vweird.f32 %v2227
    %vm2234 = vmor %vm2232, %vm2233
    %v2235 = vsel %vm2234, %v2227, %v2231
    %v2236 = vand.u32 2147483647, %v2211
    %vm2237 = vcmp.eq.f32.partialorder %v2236, 8.507059e+37
    %v2238 = vand.u32 %v2211, 2147483648
    %v2239 = vor.u32 1.1754944e-38, %v2238
    %v2240 = vsel %vm2237, %v2239, %v2235
    %v2241 = vmul.f32 1.0, %v2240
    %vm2242 = vcmask 7168
    %2243 = vst.msk [vmem:[%s7] sm:$0xff] %vm2242, %v2226
    %2244 = vst.msk [vmem:[%s7 + $0x8] sm:$0xff] %vm2242, %v2241
    // Predicated region
    $region38: #{discriminator_forward.1} parent=1 // pred_check
      _
    $region39: #{discriminator_forward.1} parent=1 // pred_check_branch
      %2246 = sbr.rel (0) target = $region41
    $region40: #{discriminator_forward.1} parent=1 // pred_region
      _
    $region41: #{discriminator_forward.1} parent=1 // pred_fallthru
      _
    // Predicated region
    $region42: #{discriminator_forward.1} parent=1 // pred_check
      _
    $region43: #{discriminator_forward.1} parent=1 // pred_check_branch
      %2248 = sbr.rel (0) target = $region45
    $region44: #{discriminator_forward.1} parent=1 // pred_region
      _
    $region45: #{discriminator_forward.1} parent=1 // pred_fallthru
      _
    %2249 = vsyncpa [#allocation4], 1
    %2250 = vsyncpa [#allocation6], 1

</llo_original>
